<compile_context>
chip_gen: v7x
topology: tpu7x:2x2x1
jax: 0.10.0
libtpu: 0.0.40
codegen_flags: <defaults>
</compile_context>

<pallas_src>
import jax
import jax.numpy as jnp
from jax.experimental import pallas as pl
from jax.experimental.pallas import tpu as pltpu


def _ru8(v):
    return (v + 7) // 8 * 8


def _build_layout(n_layers, n_features, n_hidden):
    """Row offsets of each parameter section inside the packed weight slab.

    Every section starts on an 8-row boundary and uses lanes [0, section_width)
    so all in-kernel reads are tile-aligned static slices.
    """
    rows = {}
    r = _ru8(n_layers * n_hidden)            # block-diag Whh occupies rows [0, L*H)
    rows["wih0"] = r
    r += _ru8(n_features)
    rows["b0"] = r
    r += 8
    rows["wih_up"] = []
    rows["b_up"] = []
    for _ in range(1, n_layers):
        rows["wih_up"].append(r)
        r += _ru8(n_hidden)
        rows["b_up"].append(r)
        r += 8
    rows["head"] = r
    r += 8
    rows["total"] = r
    width = max(4 * n_hidden, n_layers * 4 * n_hidden)
    return rows, width


def _make_kernel(n_layers, T, Bp, B, F, H, rows):
    G = 4 * H
    LH = n_layers * H
    BW = n_layers * G

    def kernel(x_ref, slab_ref, out_ref, pre_ref):
        # ---- One-time weight reads (prologue; a handful of vregs at H=32) ----
        whh_block = slab_ref[0:LH, 0:BW]                   # (L*H, L*4H) block-diag
        r0 = rows["wih0"]
        wih0 = slab_ref[r0:r0 + F, 0:G]                    # (F, 4H)
        rb0 = rows["b0"]
        b0 = slab_ref[rb0:rb0 + 1, 0:G]                    # (1, 4H)
        wih_up, b_up = [], []
        for i in range(n_layers - 1):
            rw = rows["wih_up"][i]
            rbb = rows["b_up"][i]
            wih_up.append(slab_ref[rw:rw + H, 0:G])        # (H, 4H)
            b_up.append(slab_ref[rbb:rbb + 1, 0:G])        # (1, 4H)
        rh = rows["head"]
        lin_w = slab_ref[rh:rh + 1, 0:H]                   # (1, H)
        lin_b = slab_ref[rh + 1:rh + 2, 0:1]               # (1, 1)
        conv_w = slab_ref[rh + 2:rh + 3, 0:1]              # (1, 1)
        conv_b = slab_ref[rh + 3:rh + 4, 0:1]              # (1, 1)
        para = slab_ref[rh + 4:rh + 5, 0:1]                # (1, 1)

        # ---- Hoisted layer-0 input projection over the whole padded sequence:
        # one (T*Bp, F) @ (F, 4H) matmul, off the serial recurrence chain. ----
        pre_ref[...] = (jnp.dot(x_ref[...], wih0,
                                preferred_element_type=jnp.float32) + b0)

        h = [jnp.zeros((Bp, H), jnp.float32) for _ in range(n_layers)]
        c = [jnp.zeros((Bp, H), jnp.float32) for _ in range(n_layers)]

        # ---- Fully unrolled time loop, all layers fused per timestep. ----
        for t in range(T):
            # Fused block-diagonal hidden-hidden matmul (uses only t-1 state).
            h_cat = h[0] if n_layers == 1 else jnp.concatenate(h, axis=1)
            hh_all = jnp.dot(h_cat, whh_block,
                             preferred_element_type=jnp.float32)  # (Bp, L*4H)
            for l in range(n_layers):
                hh_l = hh_all[:, l * G:(l + 1) * G]
                if l == 0:
                    # Aligned (Bp, 4H) tile load; pure value add chain (MRB-friendly).
                    gates = pre_ref[t * Bp:(t + 1) * Bp, :] + hh_l
                else:
                    gates = (jnp.dot(h[l - 1], wih_up[l - 1],
                                     preferred_element_type=jnp.float32)
                             + hh_l + b_up[l - 1])
                # Two full-lane EUP pushes here (+ tanh(c) below) per layer-step.
                s = jax.nn.sigmoid(gates)                  # (Bp, 4H)
                tg = jnp.tanh(gates)                       # (Bp, 4H)
                i_g = s[:, 0:H]
                f_g = s[:, H:2 * H]
                o_g = s[:, 3 * H:4 * H]
                g_g = tg[:, 2 * H:3 * H]
                c[l] = f_g * c[l] + i_g * g_g
                h[l] = o_g * jnp.tanh(c[l])

        # ---- Head: Linear(H->1) -> Conv1d(1,1,1) scalar affine -> softmax.
        # Lane-major (1, Bp): y[0, b] = lin_w . h_last[b, :] ----
        y = jnp.einsum("oh,bh->ob", lin_w, h[n_layers - 1],
                       preferred_element_type=jnp.float32) + lin_b  # (1, Bp)
        y = conv_w * y + conv_b
        logits = jnp.concatenate([y[:, 0:B], para], axis=1)         # (1, B+1)
        e = jnp.exp(logits - jnp.max(logits))
        out_ref[...] = e * (1.0 / jnp.sum(e))                       # single lane store

    return kernel


def eiie_lstm_pallas(x, params):
    """x: (B, T, F) float32; returns (B+1,) softmax vector."""
    B, T, F = x.shape
    H = params["lin_w"].shape[1]
    n_layers = len(params["layers"])
    G = 4 * H
    Bp = _ru8(B)   # pad batch to full sublane groups (8 at B=2)

    # Time-major, batch padded to Bp: every per-step tile in the kernel is
    # (Bp, *)-aligned.  Padded rows see zero input and are dropped in the head.
    x_tm = jnp.transpose(x, (1, 0, 2)).astype(jnp.float32)          # (T, B, F)
    x_tm = jnp.pad(x_tm, ((0, 0), (0, Bp - B), (0, 0)))             # (T, Bp, F)
    x_tm = x_tm.reshape(T * Bp, F)

    # Pack ALL parameters into one aligned f32 slab -> 2 input DMAs total.
    rows, width = _build_layout(n_layers, F, H)
    slab = jnp.zeros((rows["total"], width), jnp.float32)
    for l, (wih, whh, bih, bhh) in enumerate(params["layers"]):
        # Block-diagonal hidden-hidden weight (pre-transposed to (H, 4H)).
        slab = slab.at[l * H:(l + 1) * H, l * G:(l + 1) * G].set(
            whh.T.astype(jnp.float32))
        bias = (bih + bhh).astype(jnp.float32)                      # combined bias
        if l == 0:
            slab = slab.at[rows["wih0"]:rows["wih0"] + F, 0:G].set(
                wih.T.astype(jnp.float32))
            slab = slab.at[rows["b0"], 0:G].set(bias)
        else:
            rw = rows["wih_up"][l - 1]
            rb = rows["b_up"][l - 1]
            slab = slab.at[rw:rw + H, 0:G].set(wih.T.astype(jnp.float32))
            slab = slab.at[rb, 0:G].set(bias)
    rh = rows["head"]
    slab = slab.at[rh, 0:H].set(params["lin_w"].reshape(H).astype(jnp.float32))
    slab = slab.at[rh + 1, 0].set(params["lin_b"].reshape(()).astype(jnp.float32))
    slab = slab.at[rh + 2, 0].set(params["conv_w"].reshape(()).astype(jnp.float32))
    slab = slab.at[rh + 3, 0].set(params["conv_b"].reshape(()).astype(jnp.float32))
    slab = slab.at[rh + 4, 0].set(params["para"].reshape(()).astype(jnp.float32))

    # Advisory cost estimate so XLA can overlap this us-scale custom call.
    flops = (2 * T * Bp * F * G
             + 2 * T * Bp * (n_layers * H) * (n_layers * G)
             + 2 * T * Bp * H * G * max(n_layers - 1, 0)
             + 2 * Bp * H)
    transcendentals = T * n_layers * Bp * (2 * G + H) + (B + 1)
    bytes_accessed = 4 * (x_tm.size + slab.size + (B + 1))

    vmem = pl.BlockSpec(memory_space=pltpu.MemorySpace.VMEM)
    out = pl.pallas_call(
        _make_kernel(n_layers, T, Bp, B, F, H, rows),
        out_shape=jax.ShapeDtypeStruct((1, B + 1), jnp.float32),
        in_specs=[vmem, vmem],
        out_specs=vmem,
        # Hoisted layer-0 pre-activations, 8-sublane aligned per timestep.
        scratch_shapes=[pltpu.VMEM((T * Bp, G), jnp.float32)],
        cost_estimate=pl.CostEstimate(
            flops=int(flops),
            transcendentals=int(transcendentals),
            bytes_accessed=int(bytes_accessed)),
    )(x_tm, slab)
    return out.reshape(-1)


def eiie_lstm_ref(x, params):
    """Pure-JAX reference matching the PyTorch forward."""
    B, T, _ = x.shape
    H = params["lin_w"].shape[1]
    seq = x.astype(jnp.float32)
    for (wih, whh, bih, bhh) in params["layers"]:
        h = jnp.zeros((B, H), jnp.float32)
        c = jnp.zeros((B, H), jnp.float32)
        outs = []
        for t in range(T):
            gates = seq[:, t, :] @ wih.T + bih + h @ whh.T + bhh
            i = jax.nn.sigmoid(gates[:, :H])
            f = jax.nn.sigmoid(gates[:, H:2 * H])
            g = jnp.tanh(gates[:, 2 * H:3 * H])
            o = jax.nn.sigmoid(gates[:, 3 * H:])
            c = f * c + i * g
            h = o * jnp.tanh(c)
            outs.append(h)
        seq = jnp.stack(outs, axis=1)
    y = seq[:, -1, :] @ params["lin_w"].T + params["lin_b"]         # (B, 1)
    y = params["conv_w"].reshape(()) * y + params["conv_b"].reshape(())
    v = jnp.concatenate([y.reshape(-1), params["para"]], axis=0)
    return jax.nn.softmax(v, axis=0)


def init_params(key, n_features, n_layers, n_hidden):
    """Deterministic synthetic params with PyTorch-style shapes."""
    k = 1.0 / jnp.sqrt(jnp.float32(n_hidden))
    keys = iter(jax.random.split(key, 4 * n_layers + 4))

    def u(shape, scale=k):
        return jax.random.uniform(next(keys), shape, jnp.float32, -scale, scale)

    layers = []
    for l in range(n_layers):
        in_l = n_features if l == 0 else n_hidden
        layers.append((
            u((4 * n_hidden, in_l)),      # weight_ih_l{l}
            u((4 * n_hidden, n_hidden)),  # weight_hh_l{l}
            u((4 * n_hidden,)),           # bias_ih_l{l}
            u((4 * n_hidden,)),           # bias_hh_l{l}
        ))
    return {
        "layers": layers,
        "lin_w": u((1, n_hidden)),
        "lin_b": u((1,)),
        "conv_w": u((1, 1, 1), 1.0),
        "conv_b": u((1,), 1.0),
        "para": jnp.ones((1,), jnp.float32),
    }


if __name__ == "__main__":
    B, T, F, H, L = 2, 8, 4, 32, 2

    key = jax.random.PRNGKey(0)
    kx, kp = jax.random.split(key)
    x = jax.random.normal(kx, (B, T, F), jnp.float32)
    params = init_params(kp, F, L, H)

    out = jax.block_until_ready(eiie_lstm_pallas(x, params))
    ref = jax.block_until_ready(eiie_lstm_ref(x, params))

    assert out.shape == (B + 1,), out.shape
    assert jnp.allclose(jnp.sum(out), 1.0, atol=1e-5)
    assert jnp.allclose(out, ref, atol=2e-5, rtol=2e-5), (out, ref)
    print("KERNEL_OK")
</pallas_src>

<mosaic_0001>
module attributes {stable_mosaic.version = 11 : i64} {
  func.func @kernel(%arg0: memref<64x4xf32, #tpu.memory_space<vmem>>, %arg1: memref<128x256xf32, #tpu.memory_space<vmem>>, %arg2: memref<1x3xf32, #tpu.memory_space<vmem>>, %arg3: memref<64x128xf32, #tpu.memory_space<vmem>>) attributes {dimension_semantics = [], scalar_prefetch = 0 : i64, scratch_operands = 1 : i64, tpu.core_type = #tpu.core_type<tc>} {
    %c0 = arith.constant 0 : index
    %c0_0 = arith.constant 0 : index
    %0 = vector.load %arg1[%c0, %c0_0] : memref<128x256xf32, #tpu.memory_space<vmem>>, vector<64x256xf32>
    %c64 = arith.constant 64 : index
    %c0_1 = arith.constant 0 : index
    %1 = vector.load %arg1[%c64, %c0_1] : memref<128x256xf32, #tpu.memory_space<vmem>>, vector<4x128xf32>
    %c72 = arith.constant 72 : index
    %c0_2 = arith.constant 0 : index
    %2 = vector.load %arg1[%c72, %c0_2] : memref<128x256xf32, #tpu.memory_space<vmem>>, vector<1x128xf32>
    %c80 = arith.constant 80 : index
    %c0_3 = arith.constant 0 : index
    %3 = vector.load %arg1[%c80, %c0_3] : memref<128x256xf32, #tpu.memory_space<vmem>>, vector<32x128xf32>
    %c112 = arith.constant 112 : index
    %c0_4 = arith.constant 0 : index
    %4 = vector.load %arg1[%c112, %c0_4] : memref<128x256xf32, #tpu.memory_space<vmem>>, vector<1x128xf32>
    %c120 = arith.constant 120 : index
    %c0_5 = arith.constant 0 : index
    %5 = vector.load %arg1[%c120, %c0_5] : memref<128x256xf32, #tpu.memory_space<vmem>>, vector<1x32xf32>
    %c121 = arith.constant 121 : index
    %c0_6 = arith.constant 0 : index
    %6 = vector.load %arg1[%c121, %c0_6] : memref<128x256xf32, #tpu.memory_space<vmem>>, vector<1x1xf32>
    %c122 = arith.constant 122 : index
    %c0_7 = arith.constant 0 : index
    %7 = vector.load %arg1[%c122, %c0_7] : memref<128x256xf32, #tpu.memory_space<vmem>>, vector<1x1xf32>
    %c123 = arith.constant 123 : index
    %c0_8 = arith.constant 0 : index
    %8 = vector.load %arg1[%c123, %c0_8] : memref<128x256xf32, #tpu.memory_space<vmem>>, vector<1x1xf32>
    %c124 = arith.constant 124 : index
    %c0_9 = arith.constant 0 : index
    %9 = vector.load %arg1[%c124, %c0_9] : memref<128x256xf32, #tpu.memory_space<vmem>>, vector<1x1xf32>
    %c0_10 = arith.constant 0 : index
    %c0_11 = arith.constant 0 : index
    %10 = vector.load %arg0[%c0_10, %c0_11] : memref<64x4xf32, #tpu.memory_space<vmem>>, vector<64x4xf32>
    %cst = arith.constant dense<0.000000e+00> : vector<64x128xf32>
    %11 = tpu.matmul %10, %1, %cst {dimension_numbers = #tpu.dot_dimension_numbers<[1], [0], [0], [1], [0, 0, 1, 1], [], []>} : vector<64x4xf32>, vector<4x128xf32>, vector<64x128xf32> -> vector<64x128xf32>
    %12 = vector.broadcast %2 : vector<1x128xf32> to vector<64x128xf32>
    %13 = arith.addf %11, %12 : vector<64x128xf32>
    %c0_12 = arith.constant 0 : index
    %c0_13 = arith.constant 0 : index
    %14 = vector.load %arg3[%c0_12, %c0_13] : memref<64x128xf32, #tpu.memory_space<vmem>>, vector<64x128xf32>
    tpu.vector_store %arg3[%c0_12, %c0_13], %13 {strides = array<i32>} : memref<64x128xf32, #tpu.memory_space<vmem>>, vector<64x128xf32>,
    %cst_14 = arith.constant 0.000000e+00 : f32
    %15 = vector.broadcast %cst_14 : f32 to vector<8x32xf32>
    %cst_15 = arith.constant 0.000000e+00 : f32
    %16 = vector.broadcast %cst_15 : f32 to vector<8x32xf32>
    %cst_16 = arith.constant 0.000000e+00 : f32
    %17 = vector.broadcast %cst_16 : f32 to vector<8x32xf32>
    %cst_17 = arith.constant 0.000000e+00 : f32
    %18 = vector.broadcast %cst_17 : f32 to vector<8x32xf32>
    %19 = tpu.concatenate %15, %16 in 1 : vector<8x32xf32>, vector<8x32xf32> -> vector<8x64xf32>
    %cst_18 = arith.constant dense<0.000000e+00> : vector<8x256xf32>
    %20 = tpu.matmul %19, %0, %cst_18 {dimension_numbers = #tpu.dot_dimension_numbers<[1], [0], [0], [1], [0, 0, 1, 1], [], []>} : vector<8x64xf32>, vector<64x256xf32>, vector<8x256xf32> -> vector<8x256xf32>
    %21 = vector.extract_strided_slice %20 {offsets = [0, 0], sizes = [8, 128], strides = [1, 1]} : vector<8x256xf32> to vector<8x128xf32>
    %c0_19 = arith.constant 0 : index
    %c0_20 = arith.constant 0 : index
    %22 = vector.load %arg3[%c0_19, %c0_20] : memref<64x128xf32, #tpu.memory_space<vmem>>, vector<8x128xf32>
    %23 = arith.addf %22, %21 : vector<8x128xf32>
    %24 = arith.negf %23 : vector<8x128xf32>
    %25 = math.exp %24 : vector<8x128xf32>
    %cst_21 = arith.constant 1.000000e+00 : f32
    %26 = vector.broadcast %cst_21 : f32 to vector<8x128xf32>
    %27 = arith.addf %26, %25 : vector<8x128xf32>
    %28 = arith.divf %26, %27 : vector<8x128xf32>
    %29 = math.tanh %23 : vector<8x128xf32>
    %30 = vector.extract_strided_slice %28 {offsets = [0, 0], sizes = [8, 32], strides = [1, 1]} : vector<8x128xf32> to vector<8x32xf32>
    %31 = vector.extract_strided_slice %28 {offsets = [0, 32], sizes = [8, 32], strides = [1, 1]} : vector<8x128xf32> to vector<8x32xf32>
    %32 = vector.extract_strided_slice %28 {offsets = [0, 96], sizes = [8, 32], strides = [1, 1]} : vector<8x128xf32> to vector<8x32xf32>
    %33 = vector.extract_strided_slice %29 {offsets = [0, 64], sizes = [8, 32], strides = [1, 1]} : vector<8x128xf32> to vector<8x32xf32>
    %34 = arith.mulf %31, %17 : vector<8x32xf32>
    %35 = arith.mulf %30, %33 : vector<8x32xf32>
    %36 = arith.addf %34, %35 : vector<8x32xf32>
    %37 = math.tanh %36 : vector<8x32xf32>
    %38 = arith.mulf %32, %37 : vector<8x32xf32>
    %39 = vector.extract_strided_slice %20 {offsets = [0, 128], sizes = [8, 128], strides = [1, 1]} : vector<8x256xf32> to vector<8x128xf32>
    %cst_22 = arith.constant dense<0.000000e+00> : vector<8x128xf32>
    %40 = tpu.matmul %38, %3, %cst_22 {dimension_numbers = #tpu.dot_dimension_numbers<[1], [0], [0], [1], [0, 0, 1, 1], [], []>} : vector<8x32xf32>, vector<32x128xf32>, vector<8x128xf32> -> vector<8x128xf32>
    %41 = arith.addf %40, %39 : vector<8x128xf32>
    %42 = vector.broadcast %4 : vector<1x128xf32> to vector<8x128xf32>
    %43 = arith.addf %41, %42 : vector<8x128xf32>
    %44 = arith.negf %43 : vector<8x128xf32>
    %45 = math.exp %44 : vector<8x128xf32>
    %cst_23 = arith.constant 1.000000e+00 : f32
    %46 = vector.broadcast %cst_23 : f32 to vector<8x128xf32>
    %47 = arith.addf %46, %45 : vector<8x128xf32>
    %48 = arith.divf %46, %47 : vector<8x128xf32>
    %49 = math.tanh %43 : vector<8x128xf32>
    %50 = vector.extract_strided_slice %48 {offsets = [0, 0], sizes = [8, 32], strides = [1, 1]} : vector<8x128xf32> to vector<8x32xf32>
    %51 = vector.extract_strided_slice %48 {offsets = [0, 32], sizes = [8, 32], strides = [1, 1]} : vector<8x128xf32> to vector<8x32xf32>
    %52 = vector.extract_strided_slice %48 {offsets = [0, 96], sizes = [8, 32], strides = [1, 1]} : vector<8x128xf32> to vector<8x32xf32>
    %53 = vector.extract_strided_slice %49 {offsets = [0, 64], sizes = [8, 32], strides = [1, 1]} : vector<8x128xf32> to vector<8x32xf32>
    %54 = arith.mulf %51, %18 : vector<8x32xf32>
    %55 = arith.mulf %50, %53 : vector<8x32xf32>
    %56 = arith.addf %54, %55 : vector<8x32xf32>
    %57 = math.tanh %56 : vector<8x32xf32>
    %58 = arith.mulf %52, %57 : vector<8x32xf32>
    %59 = tpu.concatenate %38, %58 in 1 : vector<8x32xf32>, vector<8x32xf32> -> vector<8x64xf32>
    %cst_24 = arith.constant dense<0.000000e+00> : vector<8x256xf32>
    %60 = tpu.matmul %59, %0, %cst_24 {dimension_numbers = #tpu.dot_dimension_numbers<[1], [0], [0], [1], [0, 0, 1, 1], [], []>} : vector<8x64xf32>, vector<64x256xf32>, vector<8x256xf32> -> vector<8x256xf32>
    %61 = vector.extract_strided_slice %60 {offsets = [0, 0], sizes = [8, 128], strides = [1, 1]} : vector<8x256xf32> to vector<8x128xf32>
    %c8 = arith.constant 8 : index
    %c0_25 = arith.constant 0 : index
    %62 = vector.load %arg3[%c8, %c0_25] : memref<64x128xf32, #tpu.memory_space<vmem>>, vector<8x128xf32>
    %63 = arith.addf %62, %61 : vector<8x128xf32>
    %64 = arith.negf %63 : vector<8x128xf32>
    %65 = math.exp %64 : vector<8x128xf32>
    %cst_26 = arith.constant 1.000000e+00 : f32
    %66 = vector.broadcast %cst_26 : f32 to vector<8x128xf32>
    %67 = arith.addf %66, %65 : vector<8x128xf32>
    %68 = arith.divf %66, %67 : vector<8x128xf32>
    %69 = math.tanh %63 : vector<8x128xf32>
    %70 = vector.extract_strided_slice %68 {offsets = [0, 0], sizes = [8, 32], strides = [1, 1]} : vector<8x128xf32> to vector<8x32xf32>
    %71 = vector.extract_strided_slice %68 {offsets = [0, 32], sizes = [8, 32], strides = [1, 1]} : vector<8x128xf32> to vector<8x32xf32>
    %72 = vector.extract_strided_slice %68 {offsets = [0, 96], sizes = [8, 32], strides = [1, 1]} : vector<8x128xf32> to vector<8x32xf32>
    %73 = vector.extract_strided_slice %69 {offsets = [0, 64], sizes = [8, 32], strides = [1, 1]} : vector<8x128xf32> to vector<8x32xf32>
    %74 = arith.mulf %71, %36 : vector<8x32xf32>
    %75 = arith.mulf %70, %73 : vector<8x32xf32>
    %76 = arith.addf %74, %75 : vector<8x32xf32>
    %77 = math.tanh %76 : vector<8x32xf32>
    %78 = arith.mulf %72, %77 : vector<8x32xf32>
    %79 = vector.extract_strided_slice %60 {offsets = [0, 128], sizes = [8, 128], strides = [1, 1]} : vector<8x256xf32> to vector<8x128xf32>
    %cst_27 = arith.constant dense<0.000000e+00> : vector<8x128xf32>
    %80 = tpu.matmul %78, %3, %cst_27 {dimension_numbers = #tpu.dot_dimension_numbers<[1], [0], [0], [1], [0, 0, 1, 1], [], []>} : vector<8x32xf32>, vector<32x128xf32>, vector<8x128xf32> -> vector<8x128xf32>
    %81 = arith.addf %80, %79 : vector<8x128xf32>
    %82 = vector.broadcast %4 : vector<1x128xf32> to vector<8x128xf32>
    %83 = arith.addf %81, %82 : vector<8x128xf32>
    %84 = arith.negf %83 : vector<8x128xf32>
    %85 = math.exp %84 : vector<8x128xf32>
    %cst_28 = arith.constant 1.000000e+00 : f32
    %86 = vector.broadcast %cst_28 : f32 to vector<8x128xf32>
    %87 = arith.addf %86, %85 : vector<8x128xf32>
    %88 = arith.divf %86, %87 : vector<8x128xf32>
    %89 = math.tanh %83 : vector<8x128xf32>
    %90 = vector.extract_strided_slice %88 {offsets = [0, 0], sizes = [8, 32], strides = [1, 1]} : vector<8x128xf32> to vector<8x32xf32>
    %91 = vector.extract_strided_slice %88 {offsets = [0, 32], sizes = [8, 32], strides = [1, 1]} : vector<8x128xf32> to vector<8x32xf32>
    %92 = vector.extract_strided_slice %88 {offsets = [0, 96], sizes = [8, 32], strides = [1, 1]} : vector<8x128xf32> to vector<8x32xf32>
    %93 = vector.extract_strided_slice %89 {offsets = [0, 64], sizes = [8, 32], strides = [1, 1]} : vector<8x128xf32> to vector<8x32xf32>
    %94 = arith.mulf %91, %56 : vector<8x32xf32>
    %95 = arith.mulf %90, %93 : vector<8x32xf32>
    %96 = arith.addf %94, %95 : vector<8x32xf32>
    %97 = math.tanh %96 : vector<8x32xf32>
    %98 = arith.mulf %92, %97 : vector<8x32xf32>
    %99 = tpu.concatenate %78, %98 in 1 : vector<8x32xf32>, vector<8x32xf32> -> vector<8x64xf32>
    %cst_29 = arith.constant dense<0.000000e+00> : vector<8x256xf32>
    %100 = tpu.matmul %99, %0, %cst_29 {dimension_numbers = #tpu.dot_dimension_numbers<[1], [0], [0], [1], [0, 0, 1, 1], [], []>} : vector<8x64xf32>, vector<64x256xf32>, vector<8x256xf32> -> vector<8x256xf32>
    %101 = vector.extract_strided_slice %100 {offsets = [0, 0], sizes = [8, 128], strides = [1, 1]} : vector<8x256xf32> to vector<8x128xf32>
    %c16 = arith.constant 16 : index
    %c0_30 = arith.constant 0 : index
    %102 = vector.load %arg3[%c16, %c0_30] : memref<64x128xf32, #tpu.memory_space<vmem>>, vector<8x128xf32>
    %103 = arith.addf %102, %101 : vector<8x128xf32>
    %104 = arith.negf %103 : vector<8x128xf32>
    %105 = math.exp %104 : vector<8x128xf32>
    %cst_31 = arith.constant 1.000000e+00 : f32
    %106 = vector.broadcast %cst_31 : f32 to vector<8x128xf32>
    %107 = arith.addf %106, %105 : vector<8x128xf32>
    %108 = arith.divf %106, %107 : vector<8x128xf32>
    %109 = math.tanh %103 : vector<8x128xf32>
    %110 = vector.extract_strided_slice %108 {offsets = [0, 0], sizes = [8, 32], strides = [1, 1]} : vector<8x128xf32> to vector<8x32xf32>
    %111 = vector.extract_strided_slice %108 {offsets = [0, 32], sizes = [8, 32], strides = [1, 1]} : vector<8x128xf32> to vector<8x32xf32>
    %112 = vector.extract_strided_slice %108 {offsets = [0, 96], sizes = [8, 32], strides = [1, 1]} : vector<8x128xf32> to vector<8x32xf32>
    %113 = vector.extract_strided_slice %109 {offsets = [0, 64], sizes = [8, 32], strides = [1, 1]} : vector<8x128xf32> to vector<8x32xf32>
    %114 = arith.mulf %111, %76 : vector<8x32xf32>
    %115 = arith.mulf %110, %113 : vector<8x32xf32>
    %116 = arith.addf %114, %115 : vector<8x32xf32>
    %117 = math.tanh %116 : vector<8x32xf32>
    %118 = arith.mulf %112, %117 : vector<8x32xf32>
    %119 = vector.extract_strided_slice %100 {offsets = [0, 128], sizes = [8, 128], strides = [1, 1]} : vector<8x256xf32> to vector<8x128xf32>
    %cst_32 = arith.constant dense<0.000000e+00> : vector<8x128xf32>
    %120 = tpu.matmul %118, %3, %cst_32 {dimension_numbers = #tpu.dot_dimension_numbers<[1], [0], [0], [1], [0, 0, 1, 1], [], []>} : vector<8x32xf32>, vector<32x128xf32>, vector<8x128xf32> -> vector<8x128xf32>
    %121 = arith.addf %120, %119 : vector<8x128xf32>
    %122 = vector.broadcast %4 : vector<1x128xf32> to vector<8x128xf32>
    %123 = arith.addf %121, %122 : vector<8x128xf32>
    %124 = arith.negf %123 : vector<8x128xf32>
    %125 = math.exp %124 : vector<8x128xf32>
    %cst_33 = arith.constant 1.000000e+00 : f32
    %126 = vector.broadcast %cst_33 : f32 to vector<8x128xf32>
    %127 = arith.addf %126, %125 : vector<8x128xf32>
    %128 = arith.divf %126, %127 : vector<8x128xf32>
    %129 = math.tanh %123 : vector<8x128xf32>
    %130 = vector.extract_strided_slice %128 {offsets = [0, 0], sizes = [8, 32], strides = [1, 1]} : vector<8x128xf32> to vector<8x32xf32>
    %131 = vector.extract_strided_slice %128 {offsets = [0, 32], sizes = [8, 32], strides = [1, 1]} : vector<8x128xf32> to vector<8x32xf32>
    %132 = vector.extract_strided_slice %128 {offsets = [0, 96], sizes = [8, 32], strides = [1, 1]} : vector<8x128xf32> to vector<8x32xf32>
    %133 = vector.extract_strided_slice %129 {offsets = [0, 64], sizes = [8, 32], strides = [1, 1]} : vector<8x128xf32> to vector<8x32xf32>
    %134 = arith.mulf %131, %96 : vector<8x32xf32>
    %135 = arith.mulf %130, %133 : vector<8x32xf32>
    %136 = arith.addf %134, %135 : vector<8x32xf32>
    %137 = math.tanh %136 : vector<8x32xf32>
    %138 = arith.mulf %132, %137 : vector<8x32xf32>
    %139 = tpu.concatenate %118, %138 in 1 : vector<8x32xf32>, vector<8x32xf32> -> vector<8x64xf32>
    %cst_34 = arith.constant dense<0.000000e+00> : vector<8x256xf32>
    %140 = tpu.matmul %139, %0, %cst_34 {dimension_numbers = #tpu.dot_dimension_numbers<[1], [0], [0], [1], [0, 0, 1, 1], [], []>} : vector<8x64xf32>, vector<64x256xf32>, vector<8x256xf32> -> vector<8x256xf32>
    %141 = vector.extract_strided_slice %140 {offsets = [0, 0], sizes = [8, 128], strides = [1, 1]} : vector<8x256xf32> to vector<8x128xf32>
    %c24 = arith.constant 24 : index
    %c0_35 = arith.constant 0 : index
    %142 = vector.load %arg3[%c24, %c0_35] : memref<64x128xf32, #tpu.memory_space<vmem>>, vector<8x128xf32>
    %143 = arith.addf %142, %141 : vector<8x128xf32>
    %144 = arith.negf %143 : vector<8x128xf32>
    %145 = math.exp %144 : vector<8x128xf32>
    %cst_36 = arith.constant 1.000000e+00 : f32
    %146 = vector.broadcast %cst_36 : f32 to vector<8x128xf32>
    %147 = arith.addf %146, %145 : vector<8x128xf32>
    %148 = arith.divf %146, %147 : vector<8x128xf32>
    %149 = math.tanh %143 : vector<8x128xf32>
    %150 = vector.extract_strided_slice %148 {offsets = [0, 0], sizes = [8, 32], strides = [1, 1]} : vector<8x128xf32> to vector<8x32xf32>
    %151 = vector.extract_strided_slice %148 {offsets = [0, 32], sizes = [8, 32], strides = [1, 1]} : vector<8x128xf32> to vector<8x32xf32>
    %152 = vector.extract_strided_slice %148 {offsets = [0, 96], sizes = [8, 32], strides = [1, 1]} : vector<8x128xf32> to vector<8x32xf32>
    %153 = vector.extract_strided_slice %149 {offsets = [0, 64], sizes = [8, 32], strides = [1, 1]} : vector<8x128xf32> to vector<8x32xf32>
    %154 = arith.mulf %151, %116 : vector<8x32xf32>
    %155 = arith.mulf %150, %153 : vector<8x32xf32>
    %156 = arith.addf %154, %155 : vector<8x32xf32>
    %157 = math.tanh %156 : vector<8x32xf32>
    %158 = arith.mulf %152, %157 : vector<8x32xf32>
    %159 = vector.extract_strided_slice %140 {offsets = [0, 128], sizes = [8, 128], strides = [1, 1]} : vector<8x256xf32> to vector<8x128xf32>
    %cst_37 = arith.constant dense<0.000000e+00> : vector<8x128xf32>
    %160 = tpu.matmul %158, %3, %cst_37 {dimension_numbers = #tpu.dot_dimension_numbers<[1], [0], [0], [1], [0, 0, 1, 1], [], []>} : vector<8x32xf32>, vector<32x128xf32>, vector<8x128xf32> -> vector<8x128xf32>
    %161 = arith.addf %160, %159 : vector<8x128xf32>
    %162 = vector.broadcast %4 : vector<1x128xf32> to vector<8x128xf32>
    %163 = arith.addf %161, %162 : vector<8x128xf32>
    %164 = arith.negf %163 : vector<8x128xf32>
    %165 = math.exp %164 : vector<8x128xf32>
    %cst_38 = arith.constant 1.000000e+00 : f32
    %166 = vector.broadcast %cst_38 : f32 to vector<8x128xf32>
    %167 = arith.addf %166, %165 : vector<8x128xf32>
    %168 = arith.divf %166, %167 : vector<8x128xf32>
    %169 = math.tanh %163 : vector<8x128xf32>
    %170 = vector.extract_strided_slice %168 {offsets = [0, 0], sizes = [8, 32], strides = [1, 1]} : vector<8x128xf32> to vector<8x32xf32>
    %171 = vector.extract_strided_slice %168 {offsets = [0, 32], sizes = [8, 32], strides = [1, 1]} : vector<8x128xf32> to vector<8x32xf32>
    %172 = vector.extract_strided_slice %168 {offsets = [0, 96], sizes = [8, 32], strides = [1, 1]} : vector<8x128xf32> to vector<8x32xf32>
    %173 = vector.extract_strided_slice %169 {offsets = [0, 64], sizes = [8, 32], strides = [1, 1]} : vector<8x128xf32> to vector<8x32xf32>
    %174 = arith.mulf %171, %136 : vector<8x32xf32>
    %175 = arith.mulf %170, %173 : vector<8x32xf32>
    %176 = arith.addf %174, %175 : vector<8x32xf32>
    %177 = math.tanh %176 : vector<8x32xf32>
    %178 = arith.mulf %172, %177 : vector<8x32xf32>
    %179 = tpu.concatenate %158, %178 in 1 : vector<8x32xf32>, vector<8x32xf32> -> vector<8x64xf32>
    %cst_39 = arith.constant dense<0.000000e+00> : vector<8x256xf32>
    %180 = tpu.matmul %179, %0, %cst_39 {dimension_numbers = #tpu.dot_dimension_numbers<[1], [0], [0], [1], [0, 0, 1, 1], [], []>} : vector<8x64xf32>, vector<64x256xf32>, vector<8x256xf32> -> vector<8x256xf32>
    %181 = vector.extract_strided_slice %180 {offsets = [0, 0], sizes = [8, 128], strides = [1, 1]} : vector<8x256xf32> to vector<8x128xf32>
    %c32 = arith.constant 32 : index
    %c0_40 = arith.constant 0 : index
    %182 = vector.load %arg3[%c32, %c0_40] : memref<64x128xf32, #tpu.memory_space<vmem>>, vector<8x128xf32>
    %183 = arith.addf %182, %181 : vector<8x128xf32>
    %184 = arith.negf %183 : vector<8x128xf32>
    %185 = math.exp %184 : vector<8x128xf32>
    %cst_41 = arith.constant 1.000000e+00 : f32
    %186 = vector.broadcast %cst_41 : f32 to vector<8x128xf32>
    %187 = arith.addf %186, %185 : vector<8x128xf32>
    %188 = arith.divf %186, %187 : vector<8x128xf32>
    %189 = math.tanh %183 : vector<8x128xf32>
    %190 = vector.extract_strided_slice %188 {offsets = [0, 0], sizes = [8, 32], strides = [1, 1]} : vector<8x128xf32> to vector<8x32xf32>
    %191 = vector.extract_strided_slice %188 {offsets = [0, 32], sizes = [8, 32], strides = [1, 1]} : vector<8x128xf32> to vector<8x32xf32>
    %192 = vector.extract_strided_slice %188 {offsets = [0, 96], sizes = [8, 32], strides = [1, 1]} : vector<8x128xf32> to vector<8x32xf32>
    %193 = vector.extract_strided_slice %189 {offsets = [0, 64], sizes = [8, 32], strides = [1, 1]} : vector<8x128xf32> to vector<8x32xf32>
    %194 = arith.mulf %191, %156 : vector<8x32xf32>
    %195 = arith.mulf %190, %193 : vector<8x32xf32>
    %196 = arith.addf %194, %195 : vector<8x32xf32>
    %197 = math.tanh %196 : vector<8x32xf32>
    %198 = arith.mulf %192, %197 : vector<8x32xf32>
    %199 = vector.extract_strided_slice %180 {offsets = [0, 128], sizes = [8, 128], strides = [1, 1]} : vector<8x256xf32> to vector<8x128xf32>
    %cst_42 = arith.constant dense<0.000000e+00> : vector<8x128xf32>
    %200 = tpu.matmul %198, %3, %cst_42 {dimension_numbers = #tpu.dot_dimension_numbers<[1], [0], [0], [1], [0, 0, 1, 1], [], []>} : vector<8x32xf32>, vector<32x128xf32>, vector<8x128xf32> -> vector<8x128xf32>
    %201 = arith.addf %200, %199 : vector<8x128xf32>
    %202 = vector.broadcast %4 : vector<1x128xf32> to vector<8x128xf32>
    %203 = arith.addf %201, %202 : vector<8x128xf32>
    %204 = arith.negf %203 : vector<8x128xf32>
    %205 = math.exp %204 : vector<8x128xf32>
    %cst_43 = arith.constant 1.000000e+00 : f32
    %206 = vector.broadcast %cst_43 : f32 to vector<8x128xf32>
    %207 = arith.addf %206, %205 : vector<8x128xf32>
    %208 = arith.divf %206, %207 : vector<8x128xf32>
    %209 = math.tanh %203 : vector<8x128xf32>
    %210 = vector.extract_strided_slice %208 {offsets = [0, 0], sizes = [8, 32], strides = [1, 1]} : vector<8x128xf32> to vector<8x32xf32>
    %211 = vector.extract_strided_slice %208 {offsets = [0, 32], sizes = [8, 32], strides = [1, 1]} : vector<8x128xf32> to vector<8x32xf32>
    %212 = vector.extract_strided_slice %208 {offsets = [0, 96], sizes = [8, 32], strides = [1, 1]} : vector<8x128xf32> to vector<8x32xf32>
    %213 = vector.extract_strided_slice %209 {offsets = [0, 64], sizes = [8, 32], strides = [1, 1]} : vector<8x128xf32> to vector<8x32xf32>
    %214 = arith.mulf %211, %176 : vector<8x32xf32>
    %215 = arith.mulf %210, %213 : vector<8x32xf32>
    %216 = arith.addf %214, %215 : vector<8x32xf32>
    %217 = math.tanh %216 : vector<8x32xf32>
    %218 = arith.mulf %212, %217 : vector<8x32xf32>
    %219 = tpu.concatenate %198, %218 in 1 : vector<8x32xf32>, vector<8x32xf32> -> vector<8x64xf32>
    %cst_44 = arith.constant dense<0.000000e+00> : vector<8x256xf32>
    %220 = tpu.matmul %219, %0, %cst_44 {dimension_numbers = #tpu.dot_dimension_numbers<[1], [0], [0], [1], [0, 0, 1, 1], [], []>} : vector<8x64xf32>, vector<64x256xf32>, vector<8x256xf32> -> vector<8x256xf32>
    %221 = vector.extract_strided_slice %220 {offsets = [0, 0], sizes = [8, 128], strides = [1, 1]} : vector<8x256xf32> to vector<8x128xf32>
    %c40 = arith.constant 40 : index
    %c0_45 = arith.constant 0 : index
    %222 = vector.load %arg3[%c40, %c0_45] : memref<64x128xf32, #tpu.memory_space<vmem>>, vector<8x128xf32>
    %223 = arith.addf %222, %221 : vector<8x128xf32>
    %224 = arith.negf %223 : vector<8x128xf32>
    %225 = math.exp %224 : vector<8x128xf32>
    %cst_46 = arith.constant 1.000000e+00 : f32
    %226 = vector.broadcast %cst_46 : f32 to vector<8x128xf32>
    %227 = arith.addf %226, %225 : vector<8x128xf32>
    %228 = arith.divf %226, %227 : vector<8x128xf32>
    %229 = math.tanh %223 : vector<8x128xf32>
    %230 = vector.extract_strided_slice %228 {offsets = [0, 0], sizes = [8, 32], strides = [1, 1]} : vector<8x128xf32> to vector<8x32xf32>
    %231 = vector.extract_strided_slice %228 {offsets = [0, 32], sizes = [8, 32], strides = [1, 1]} : vector<8x128xf32> to vector<8x32xf32>
    %232 = vector.extract_strided_slice %228 {offsets = [0, 96], sizes = [8, 32], strides = [1, 1]} : vector<8x128xf32> to vector<8x32xf32>
    %233 = vector.extract_strided_slice %229 {offsets = [0, 64], sizes = [8, 32], strides = [1, 1]} : vector<8x128xf32> to vector<8x32xf32>
    %234 = arith.mulf %231, %196 : vector<8x32xf32>
    %235 = arith.mulf %230, %233 : vector<8x32xf32>
    %236 = arith.addf %234, %235 : vector<8x32xf32>
    %237 = math.tanh %236 : vector<8x32xf32>
    %238 = arith.mulf %232, %237 : vector<8x32xf32>
    %239 = vector.extract_strided_slice %220 {offsets = [0, 128], sizes = [8, 128], strides = [1, 1]} : vector<8x256xf32> to vector<8x128xf32>
    %cst_47 = arith.constant dense<0.000000e+00> : vector<8x128xf32>
    %240 = tpu.matmul %238, %3, %cst_47 {dimension_numbers = #tpu.dot_dimension_numbers<[1], [0], [0], [1], [0, 0, 1, 1], [], []>} : vector<8x32xf32>, vector<32x128xf32>, vector<8x128xf32> -> vector<8x128xf32>
    %241 = arith.addf %240, %239 : vector<8x128xf32>
    %242 = vector.broadcast %4 : vector<1x128xf32> to vector<8x128xf32>
    %243 = arith.addf %241, %242 : vector<8x128xf32>
    %244 = arith.negf %243 : vector<8x128xf32>
    %245 = math.exp %244 : vector<8x128xf32>
    %cst_48 = arith.constant 1.000000e+00 : f32
    %246 = vector.broadcast %cst_48 : f32 to vector<8x128xf32>
    %247 = arith.addf %246, %245 : vector<8x128xf32>
    %248 = arith.divf %246, %247 : vector<8x128xf32>
    %249 = math.tanh %243 : vector<8x128xf32>
    %250 = vector.extract_strided_slice %248 {offsets = [0, 0], sizes = [8, 32], strides = [1, 1]} : vector<8x128xf32> to vector<8x32xf32>
    %251 = vector.extract_strided_slice %248 {offsets = [0, 32], sizes = [8, 32], strides = [1, 1]} : vector<8x128xf32> to vector<8x32xf32>
    %252 = vector.extract_strided_slice %248 {offsets = [0, 96], sizes = [8, 32], strides = [1, 1]} : vector<8x128xf32> to vector<8x32xf32>
    %253 = vector.extract_strided_slice %249 {offsets = [0, 64], sizes = [8, 32], strides = [1, 1]} : vector<8x128xf32> to vector<8x32xf32>
    %254 = arith.mulf %251, %216 : vector<8x32xf32>
    %255 = arith.mulf %250, %253 : vector<8x32xf32>
    %256 = arith.addf %254, %255 : vector<8x32xf32>
    %257 = math.tanh %256 : vector<8x32xf32>
    %258 = arith.mulf %252, %257 : vector<8x32xf32>
    %259 = tpu.concatenate %238, %258 in 1 : vector<8x32xf32>, vector<8x32xf32> -> vector<8x64xf32>
    %cst_49 = arith.constant dense<0.000000e+00> : vector<8x256xf32>
    %260 = tpu.matmul %259, %0, %cst_49 {dimension_numbers = #tpu.dot_dimension_numbers<[1], [0], [0], [1], [0, 0, 1, 1], [], []>} : vector<8x64xf32>, vector<64x256xf32>, vector<8x256xf32> -> vector<8x256xf32>
    %261 = vector.extract_strided_slice %260 {offsets = [0, 0], sizes = [8, 128], strides = [1, 1]} : vector<8x256xf32> to vector<8x128xf32>
    %c48 = arith.constant 48 : index
    %c0_50 = arith.constant 0 : index
    %262 = vector.load %arg3[%c48, %c0_50] : memref<64x128xf32, #tpu.memory_space<vmem>>, vector<8x128xf32>
    %263 = arith.addf %262, %261 : vector<8x128xf32>
    %264 = arith.negf %263 : vector<8x128xf32>
    %265 = math.exp %264 : vector<8x128xf32>
    %cst_51 = arith.constant 1.000000e+00 : f32
    %266 = vector.broadcast %cst_51 : f32 to vector<8x128xf32>
    %267 = arith.addf %266, %265 : vector<8x128xf32>
    %268 = arith.divf %266, %267 : vector<8x128xf32>
    %269 = math.tanh %263 : vector<8x128xf32>
    %270 = vector.extract_strided_slice %268 {offsets = [0, 0], sizes = [8, 32], strides = [1, 1]} : vector<8x128xf32> to vector<8x32xf32>
    %271 = vector.extract_strided_slice %268 {offsets = [0, 32], sizes = [8, 32], strides = [1, 1]} : vector<8x128xf32> to vector<8x32xf32>
    %272 = vector.extract_strided_slice %268 {offsets = [0, 96], sizes = [8, 32], strides = [1, 1]} : vector<8x128xf32> to vector<8x32xf32>
    %273 = vector.extract_strided_slice %269 {offsets = [0, 64], sizes = [8, 32], strides = [1, 1]} : vector<8x128xf32> to vector<8x32xf32>
    %274 = arith.mulf %271, %236 : vector<8x32xf32>
    %275 = arith.mulf %270, %273 : vector<8x32xf32>
    %276 = arith.addf %274, %275 : vector<8x32xf32>
    %277 = math.tanh %276 : vector<8x32xf32>
    %278 = arith.mulf %272, %277 : vector<8x32xf32>
    %279 = vector.extract_strided_slice %260 {offsets = [0, 128], sizes = [8, 128], strides = [1, 1]} : vector<8x256xf32> to vector<8x128xf32>
    %cst_52 = arith.constant dense<0.000000e+00> : vector<8x128xf32>
    %280 = tpu.matmul %278, %3, %cst_52 {dimension_numbers = #tpu.dot_dimension_numbers<[1], [0], [0], [1], [0, 0, 1, 1], [], []>} : vector<8x32xf32>, vector<32x128xf32>, vector<8x128xf32> -> vector<8x128xf32>
    %281 = arith.addf %280, %279 : vector<8x128xf32>
    %282 = vector.broadcast %4 : vector<1x128xf32> to vector<8x128xf32>
    %283 = arith.addf %281, %282 : vector<8x128xf32>
    %284 = arith.negf %283 : vector<8x128xf32>
    %285 = math.exp %284 : vector<8x128xf32>
    %cst_53 = arith.constant 1.000000e+00 : f32
    %286 = vector.broadcast %cst_53 : f32 to vector<8x128xf32>
    %287 = arith.addf %286, %285 : vector<8x128xf32>
    %288 = arith.divf %286, %287 : vector<8x128xf32>
    %289 = math.tanh %283 : vector<8x128xf32>
    %290 = vector.extract_strided_slice %288 {offsets = [0, 0], sizes = [8, 32], strides = [1, 1]} : vector<8x128xf32> to vector<8x32xf32>
    %291 = vector.extract_strided_slice %288 {offsets = [0, 32], sizes = [8, 32], strides = [1, 1]} : vector<8x128xf32> to vector<8x32xf32>
    %292 = vector.extract_strided_slice %288 {offsets = [0, 96], sizes = [8, 32], strides = [1, 1]} : vector<8x128xf32> to vector<8x32xf32>
    %293 = vector.extract_strided_slice %289 {offsets = [0, 64], sizes = [8, 32], strides = [1, 1]} : vector<8x128xf32> to vector<8x32xf32>
    %294 = arith.mulf %291, %256 : vector<8x32xf32>
    %295 = arith.mulf %290, %293 : vector<8x32xf32>
    %296 = arith.addf %294, %295 : vector<8x32xf32>
    %297 = math.tanh %296 : vector<8x32xf32>
    %298 = arith.mulf %292, %297 : vector<8x32xf32>
    %299 = tpu.concatenate %278, %298 in 1 : vector<8x32xf32>, vector<8x32xf32> -> vector<8x64xf32>
    %cst_54 = arith.constant dense<0.000000e+00> : vector<8x256xf32>
    %300 = tpu.matmul %299, %0, %cst_54 {dimension_numbers = #tpu.dot_dimension_numbers<[1], [0], [0], [1], [0, 0, 1, 1], [], []>} : vector<8x64xf32>, vector<64x256xf32>, vector<8x256xf32> -> vector<8x256xf32>
    %301 = vector.extract_strided_slice %300 {offsets = [0, 0], sizes = [8, 128], strides = [1, 1]} : vector<8x256xf32> to vector<8x128xf32>
    %c56 = arith.constant 56 : index
    %c0_55 = arith.constant 0 : index
    %302 = vector.load %arg3[%c56, %c0_55] : memref<64x128xf32, #tpu.memory_space<vmem>>, vector<8x128xf32>
    %303 = arith.addf %302, %301 : vector<8x128xf32>
    %304 = arith.negf %303 : vector<8x128xf32>
    %305 = math.exp %304 : vector<8x128xf32>
    %cst_56 = arith.constant 1.000000e+00 : f32
    %306 = vector.broadcast %cst_56 : f32 to vector<8x128xf32>
    %307 = arith.addf %306, %305 : vector<8x128xf32>
    %308 = arith.divf %306, %307 : vector<8x128xf32>
    %309 = math.tanh %303 : vector<8x128xf32>
    %310 = vector.extract_strided_slice %308 {offsets = [0, 0], sizes = [8, 32], strides = [1, 1]} : vector<8x128xf32> to vector<8x32xf32>
    %311 = vector.extract_strided_slice %308 {offsets = [0, 32], sizes = [8, 32], strides = [1, 1]} : vector<8x128xf32> to vector<8x32xf32>
    %312 = vector.extract_strided_slice %308 {offsets = [0, 96], sizes = [8, 32], strides = [1, 1]} : vector<8x128xf32> to vector<8x32xf32>
    %313 = vector.extract_strided_slice %309 {offsets = [0, 64], sizes = [8, 32], strides = [1, 1]} : vector<8x128xf32> to vector<8x32xf32>
    %314 = arith.mulf %311, %276 : vector<8x32xf32>
    %315 = arith.mulf %310, %313 : vector<8x32xf32>
    %316 = arith.addf %314, %315 : vector<8x32xf32>
    %317 = math.tanh %316 : vector<8x32xf32>
    %318 = arith.mulf %312, %317 : vector<8x32xf32>
    %319 = vector.extract_strided_slice %300 {offsets = [0, 128], sizes = [8, 128], strides = [1, 1]} : vector<8x256xf32> to vector<8x128xf32>
    %cst_57 = arith.constant dense<0.000000e+00> : vector<8x128xf32>
    %320 = tpu.matmul %318, %3, %cst_57 {dimension_numbers = #tpu.dot_dimension_numbers<[1], [0], [0], [1], [0, 0, 1, 1], [], []>} : vector<8x32xf32>, vector<32x128xf32>, vector<8x128xf32> -> vector<8x128xf32>
    %321 = arith.addf %320, %319 : vector<8x128xf32>
    %322 = vector.broadcast %4 : vector<1x128xf32> to vector<8x128xf32>
    %323 = arith.addf %321, %322 : vector<8x128xf32>
    %324 = arith.negf %323 : vector<8x128xf32>
    %325 = math.exp %324 : vector<8x128xf32>
    %cst_58 = arith.constant 1.000000e+00 : f32
    %326 = vector.broadcast %cst_58 : f32 to vector<8x128xf32>
    %327 = arith.addf %326, %325 : vector<8x128xf32>
    %328 = arith.divf %326, %327 : vector<8x128xf32>
    %329 = math.tanh %323 : vector<8x128xf32>
    %330 = vector.extract_strided_slice %328 {offsets = [0, 0], sizes = [8, 32], strides = [1, 1]} : vector<8x128xf32> to vector<8x32xf32>
    %331 = vector.extract_strided_slice %328 {offsets = [0, 32], sizes = [8, 32], strides = [1, 1]} : vector<8x128xf32> to vector<8x32xf32>
    %332 = vector.extract_strided_slice %328 {offsets = [0, 96], sizes = [8, 32], strides = [1, 1]} : vector<8x128xf32> to vector<8x32xf32>
    %333 = vector.extract_strided_slice %329 {offsets = [0, 64], sizes = [8, 32], strides = [1, 1]} : vector<8x128xf32> to vector<8x32xf32>
    %334 = arith.mulf %331, %296 : vector<8x32xf32>
    %335 = arith.mulf %330, %333 : vector<8x32xf32>
    %336 = arith.addf %334, %335 : vector<8x32xf32>
    %337 = math.tanh %336 : vector<8x32xf32>
    %338 = arith.mulf %332, %337 : vector<8x32xf32>
    "tpu.trace_start"() <{level = 10 : i32, message = "oh,bh->ob"}> : () -> ()
    %cst_59 = arith.constant dense<0.000000e+00> : vector<1x8xf32>
    %339 = tpu.matmul %5, %338, %cst_59 {dimension_numbers = #tpu.dot_dimension_numbers<[1], [1], [0], [0], [0, 0, 1, 0], [], []>} : vector<1x32xf32>, vector<8x32xf32>, vector<1x8xf32> -> vector<1x8xf32>
    "tpu.trace_stop"() : () -> ()
    %340 = vector.broadcast %6 : vector<1x1xf32> to vector<1x8xf32>
    %341 = arith.addf %339, %340 : vector<1x8xf32>
    %342 = vector.broadcast %7 : vector<1x1xf32> to vector<1x8xf32>
    %343 = arith.mulf %342, %341 : vector<1x8xf32>
    %344 = vector.broadcast %8 : vector<1x1xf32> to vector<1x8xf32>
    %345 = arith.addf %343, %344 : vector<1x8xf32>
    %346 = vector.extract_strided_slice %345 {offsets = [0, 0], sizes = [1, 2], strides = [1, 1]} : vector<1x8xf32> to vector<1x2xf32>
    %347 = tpu.concatenate %346, %9 in 1 : vector<1x2xf32>, vector<1x1xf32> -> vector<1x3xf32>
    %348 = vector.shape_cast %347 : vector<1x3xf32> to vector<1x1x3xf32>
    %cst_60 = arith.constant dense<0xFF800000> : vector<1xf32>
    %349 = vector.multi_reduction <maximumf>, %348, %cst_60 [1, 2] : vector<1x1x3xf32> to vector<1xf32>
    %350 = vector.shape_cast %349 : vector<1xf32> to vector<1x1x1xf32>
    %351 = vector.extract %350[0, 0, 0] : f32 from vector<1x1x1xf32>
    %352 = vector.broadcast %351 : f32 to vector<1x3xf32>
    %353 = arith.subf %347, %352 : vector<1x3xf32>
    %354 = math.exp %353 : vector<1x3xf32>
    %355 = vector.shape_cast %354 : vector<1x3xf32> to vector<1x1x3xf32>
    %cst_61 = arith.constant dense<0.000000e+00> : vector<1xf32>
    %356 = vector.multi_reduction <add>, %355, %cst_61 [1, 2] : vector<1x1x3xf32> to vector<1xf32>
    %357 = vector.shape_cast %356 : vector<1xf32> to vector<1x1x1xf32>
    %358 = vector.extract %357[0, 0, 0] : f32 from vector<1x1x1xf32>
    %cst_62 = arith.constant 1.000000e+00 : f32
    %359 = arith.divf %cst_62, %358 : f32
    %360 = vector.broadcast %359 : f32 to vector<1x3xf32>
    %361 = arith.mulf %354, %360 : vector<1x3xf32>
    %c0_63 = arith.constant 0 : index
    %c0_64 = arith.constant 0 : index
    %362 = vector.load %arg2[%c0_63, %c0_64] : memref<1x3xf32, #tpu.memory_space<vmem>>, vector<1x3xf32>
    tpu.vector_store %arg2[%c0_63, %c0_64], %361 {strides = array<i32>} : memref<1x3xf32, #tpu.memory_space<vmem>>, vector<1x3xf32>,
    return
  }
}

</mosaic_0001>

<llo_original>
// kernel: tpu_custom_call.1
$region0: #{tpu_custom_call.1}
  #allocation0 [shape = 'u32[]', space=smem, size = 0x4, offset = 0x4, fixed_abs, tag = 'smem constant byte address 0x4 - core index']
  #allocation1 [shape = 'u32[144,128]{1,0:T(1,128)}', space=vmem, size = 0x12000, scoped, tag = 'internal scratch']
  #allocation2 [shape = 'f32[64,128]{1,0:T(8,128)}', space=vmem, size = 0x8000, scoped, tag = 'scratch operand']
  %s0 = inlined_call_operand.vmem [shape: f32[64,4], index: 0, kind: input, shape index: {}]
  %s1 = inlined_call_operand.hbm [shape: f32[128,256], index: 1, kind: input, shape index: {}]
  %s2 = inlined_call_operand.hbm [shape: f32[1,3], index: 2, kind: output, shape index: {}]
  %s3 = sld [smem:[#allocation0]]
  $region22: #{tpu_custom_call.1} parent=0
    _
  %s5 = ssub.s32 1, %s3
  %s6 = scalar_select 0, %s5, %s3
  $region1: #{tpu_custom_call.1} parent=0
    #allocation3 [shape = 'u8[131072]{0}', space=vmem, size = 0x20000, scoped, tag = 'input window, operand 1, single buffered']
    #allocation4 [shape = 's32[1]{0}', space=sflag, size = 0x4, scoped, tag = 'scoped memory for tpu_custom_call.1']
    #allocation5 [shape = 's32[1]{0}', space=sflag, size = 0x4, scoped, tag = 'scoped memory for tpu_custom_call.1']
    #allocation6 [shape = 'u8[512]{0}', space=vmem, size = 0x400, scoped, tag = 'output window, operand 0, single buffered']
    %7 = vsyncpa [#allocation4], 0
    %8 = vsyncpa [#allocation5], 0
    // Predicated region
    $region2: #{tpu_custom_call.1} parent=1 // pred_check
      _
    $region3: #{tpu_custom_call.1} parent=1 // pred_check_branch
      %10 = sbr.rel (0) target = $region5
    $region4: #{tpu_custom_call.1} parent=1 // pred_region
      _
    $region5: #{tpu_custom_call.1} parent=1 // pred_fallthru
      _
    // Predicated region
    $region6: #{tpu_custom_call.1} parent=1 // pred_check
      _
    $region7: #{tpu_custom_call.1} parent=1 // pred_check_branch
      %12 = sbr.rel (0) target = $region9
    $region8: #{tpu_custom_call.1} parent=1 // pred_region
      %s14 = ssub.s32 4096, 4096
      %15 = vsyncadd [#allocation4], %s14
      %s16 = sshll.u32 [#allocation3], 4
      %s17 = int_to_ptr.vmem [resolvable:$true] %s16
      %22 = dma.hbm_to_vmem [thread:$0]  %s1, 4096, %s17, [#allocation4], 256, 256, 16
    $region9: #{tpu_custom_call.1} parent=1 // pred_fallthru
      _
    // Predicated region
    $region10: #{tpu_custom_call.1} parent=1 // pred_check
      _
    $region11: #{tpu_custom_call.1} parent=1 // pred_check_branch
      %24 = sbr.rel (0) target = $region13
    $region12: #{tpu_custom_call.1} parent=1 // pred_region
      %25 = dma.done [#allocation4], 4096
    $region13: #{tpu_custom_call.1} parent=1 // pred_fallthru
      _
    %v26 = vld [vmem:[#allocation3] sm:$0xff]
    %v27 = vld [vmem:[#allocation3 + $0x8] sm:$0xff]
    %v28 = vld [vmem:[#allocation3 + $0x10] sm:$0xff]
    %v29 = vld [vmem:[#allocation3 + $0x18] sm:$0xff]
    %v30 = vld [vmem:[#allocation3 + $0x20] sm:$0xff]
    %v31 = vld [vmem:[#allocation3 + $0x28] sm:$0xff]
    %v32 = vld [vmem:[#allocation3 + $0x30] sm:$0xff]
    %v33 = vld [vmem:[#allocation3 + $0x38] sm:$0xff]
    %v34 = vld [vmem:[#allocation3 + $0x40] sm:$0xff]
    %v35 = vld [vmem:[#allocation3 + $0x48] sm:$0xff]
    %v36 = vld [vmem:[#allocation3 + $0x50] sm:$0xff]
    %v37 = vld [vmem:[#allocation3 + $0x58] sm:$0xff]
    %v38 = vld [vmem:[#allocation3 + $0x60] sm:$0xff]
    %v39 = vld [vmem:[#allocation3 + $0x68] sm:$0xff]
    %v40 = vld [vmem:[#allocation3 + $0x70] sm:$0xff]
    %v41 = vld [vmem:[#allocation3 + $0x78] sm:$0xff]
    %v42 = vld [vmem:[#allocation3 + $0x80] sm:$0xf]
    %v43 = vld [vmem:[#allocation3 + $0x90] ss:$0 sm:$0xff]
    %v44 = vld [vmem:[#allocation3 + $0xa0] sm:$0xff]
    %v45 = vld [vmem:[#allocation3 + $0xb0] sm:$0xff]
    %v46 = vld [vmem:[#allocation3 + $0xc0] sm:$0xff]
    %v47 = vld [vmem:[#allocation3 + $0xd0] sm:$0xff]
    %v48 = vld [vmem:[#allocation3 + $0xe0] ss:$0 sm:$0xff]
    %v49 = vld [vmem:[#allocation3 + $0xf0] ss:$0 sm:$0xff]
    %v50 = vld [vmem:[#allocation3 + $0xf1] ss:$0 sm:$0xff]
    %v51 = vld [vmem:[#allocation3 + $0xf2] ss:$0 sm:$0xff]
    %v52 = vld [vmem:[#allocation3 + $0xf3] ss:$0 sm:$0xff]
    %v53 = vld [vmem:[#allocation3 + $0xf4] ss:$0 sm:$0xff]
    %v54 = vld [vmem:[%s0] sm:$0xff]
    %v55 = vld [vmem:[%s0 + $0x8] sm:$0xff]
    %v56 = vld [vmem:[%s0 + $0x10] sm:$0xff]
    %v57 = vld [vmem:[%s0 + $0x18] sm:$0xff]
    %v58 = vld [vmem:[%s0 + $0x20] sm:$0xff]
    %v59 = vld [vmem:[%s0 + $0x28] sm:$0xff]
    %v60 = vld [vmem:[%s0 + $0x30] sm:$0xff]
    %v61 = vld [vmem:[%s0 + $0x38] sm:$0xff]
    %vm62 = vcmask 31744
    %v64 = vsel %vm62, %v54, 0
    %v67 = vsel %vm62, %v55, 0
    %v70 = vsel %vm62, %v56, 0
    %v73 = vsel %vm62, %v57, 0
    %v76 = vsel %vm62, %v58, 0
    %v79 = vsel %vm62, %v59, 0
    %v82 = vsel %vm62, %v60, 0
    %v85 = vsel %vm62, %v61, 0
    %vm87 = vcmask 1043456
    %v89 = vsel %vm87, %v42, 0
    %91 = vmatprep.subr.mxu0 0.0
    %92 = vmatpush1.msra.mxu0 %v89
    %93 = vmatprep.subr.mxu0 0.0
    %94 = vmatpush1.msra.mxu0 0.0
    %95 = vmatprep.subr.mxu0 0.0
    %96 = vmatpush1.msra.mxu0 0.0
    %97 = vmatprep.subr.mxu0 0.0
    %98 = vmatpush1.msra.mxu0 0.0
    %99 = vmatprep.subr.mxu0 0.0
    %100 = vmatpush1.msra.mxu0 0.0
    %101 = vmatprep.subr.mxu0 0.0
    %102 = vmatpush1.msra.mxu0 0.0
    %103 = vmatprep.subr.mxu0 0.0
    %104 = vmatpush1.msra.mxu0 0.0
    %105 = vmatprep.subr.mxu0 0.0
    %106 = vmatpush1.msra.mxu0 0.0
    %107 = vmatprep.subr.mxu0 0.0
    %108 = vmatpush1.msra.mxu0 0.0
    %109 = vmatprep.subr.mxu0 0.0
    %110 = vmatpush1.msra.mxu0 0.0
    %111 = vmatprep.subr.mxu0 0.0
    %112 = vmatpush1.msra.mxu0 0.0
    %113 = vmatprep.subr.mxu0 0.0
    %114 = vmatpush1.msra.mxu0 0.0
    %115 = vmatprep.subr.mxu0 0.0
    %116 = vmatpush1.msra.mxu0 0.0
    %117 = vmatprep.subr.mxu0 0.0
    %118 = vmatpush1.msra.mxu0 0.0
    %119 = vmatprep.subr.mxu0 0.0
    %120 = vmatpush1.msra.mxu0 0.0
    %121 = vmatprep.subr.mxu0 0.0
    %122 = vmatpush1.msra.mxu0 0.0
    %123 = vmatprep.subr.mxu0 0.0
    %124 = vmatpush1.msra.mxu0 0.0
    %125 = vmatprep.subr.mxu0 0.0
    %126 = vmatpush1.msra.mxu0 0.0
    %127 = vmatprep.subr.mxu0 0.0
    %128 = vmatpush1.msra.mxu0 0.0
    %129 = vmatprep.subr.mxu0 0.0
    %130 = vmatpush1.msra.mxu0 0.0
    %131 = vmatprep.subr.mxu0 0.0
    %132 = vmatpush1.msra.mxu0 0.0
    %133 = vmatprep.subr.mxu0 0.0
    %134 = vmatpush1.msra.mxu0 0.0
    %135 = vmatprep.subr.mxu0 0.0
    %136 = vmatpush1.msra.mxu0 0.0
    %137 = vmatprep.subr.mxu0 0.0
    %138 = vmatpush1.msra.mxu0 0.0
    %139 = vmatprep.subr.mxu0 0.0
    %140 = vmatpush1.msra.mxu0 0.0
    %141 = vmatprep.subr.mxu0 0.0
    %142 = vmatpush1.msra.mxu0 0.0
    %143 = vmatprep.subr.mxu0 0.0
    %144 = vmatpush1.msra.mxu0 0.0
    %145 = vmatprep.subr.mxu0 0.0
    %146 = vmatpush1.msra.mxu0 0.0
    %147 = vmatprep.subr.mxu0 0.0
    %148 = vmatpush1.msra.mxu0 0.0
    %149 = vmatprep.subr.mxu0 0.0
    %150 = vmatpush1.msra.mxu0 0.0
    %151 = vmatprep.subr.mxu0 0.0
    %152 = vmatpush1.msra.mxu0 0.0
    %153 = vmatprep.subr.mxu0 0.0
    %154 = vmatpush1.msra.mxu0 0.0
    %155 = vmatprep.mubr.f32.mxu0 0.0
    %156 = vmatmul.mubr.f32.gmra.mrb[0].mxu0 %v64
    %v157 = vpop.f32.mrb[0].mxu0
    %v158 = vadd.f32 %v43, %v157
    %v159 = vpop.f32.mrb[0].mxu0
    %160 = vmatprep.mubr.f32.mxu0 0.0
    %161 = vmatmul.mubr.f32.gmra.mrb[0].mxu0 %v67
    %v162 = vpop.f32.mrb[0].mxu0
    %v163 = vadd.f32 %v43, %v162
    %v164 = vpop.f32.mrb[0].mxu0
    %165 = vmatprep.mubr.f32.mxu0 0.0
    %166 = vmatmul.mubr.f32.gmra.mrb[0].mxu0 %v70
    %v167 = vpop.f32.mrb[0].mxu0
    %v168 = vadd.f32 %v43, %v167
    %v169 = vpop.f32.mrb[0].mxu0
    %170 = vmatprep.mubr.f32.mxu0 0.0
    %171 = vmatmul.mubr.f32.gmra.mrb[0].mxu0 %v73
    %v172 = vpop.f32.mrb[0].mxu0
    %v173 = vadd.f32 %v43, %v172
    %v174 = vpop.f32.mrb[0].mxu0
    %175 = vmatprep.mubr.f32.mxu0 0.0
    %176 = vmatmul.mubr.f32.gmra.mrb[0].mxu0 %v76
    %v177 = vpop.f32.mrb[0].mxu0
    %v178 = vadd.f32 %v43, %v177
    %v179 = vpop.f32.mrb[0].mxu0
    %180 = vmatprep.mubr.f32.mxu0 0.0
    %181 = vmatmul.mubr.f32.gmra.mrb[0].mxu0 %v79
    %v182 = vpop.f32.mrb[0].mxu0
    %v183 = vadd.f32 %v43, %v182
    %v184 = vpop.f32.mrb[0].mxu0
    %185 = vmatprep.mubr.f32.mxu0 0.0
    %186 = vmatmul.mubr.f32.gmra.mrb[0].mxu0 %v82
    %v187 = vpop.f32.mrb[0].mxu0
    %v188 = vadd.f32 %v43, %v187
    %v189 = vpop.f32.mrb[0].mxu0
    %190 = vmatprep.mubr.f32.mxu0 0.0
    %191 = vmatmul.mubr.f32.gmra.mrb[0].mxu0 %v85
    %v192 = vpop.f32.mrb[0].mxu0
    %v193 = vadd.f32 %v43, %v192
    %v194 = vpop.f32.mrb[0].mxu0
    %195 = vdwg.mxu0
    %196 = vst [vmem:[#allocation2] sm:$0xff] %v158
    %197 = vst [vmem:[#allocation2 + $0x8] sm:$0xff] %v163
    %198 = vst [vmem:[#allocation2 + $0x10] sm:$0xff] %v168
    %199 = vst [vmem:[#allocation2 + $0x18] sm:$0xff] %v173
    %200 = vst [vmem:[#allocation2 + $0x20] sm:$0xff] %v178
    %201 = vst [vmem:[#allocation2 + $0x28] sm:$0xff] %v183
    %202 = vst [vmem:[#allocation2 + $0x30] sm:$0xff] %v188
    %203 = vst [vmem:[#allocation2 + $0x38] sm:$0xff] %v193
    %vm204 = vcmask 523264
    %v206 = vsel %vm204, 0.0, 0
    %208 = vmatprep.subr.mxu0 %v27
    %209 = vmatpush1.msra.mxu0 %v26
    %210 = vmatprep.subr.mxu0 %v29
    %211 = vmatpush1.msra.mxu0 %v28
    %212 = vmatprep.subr.mxu0 %v31
    %213 = vmatpush1.msra.mxu0 %v30
    %214 = vmatprep.subr.mxu0 %v33
    %215 = vmatpush1.msra.mxu0 %v32
    %216 = vmatprep.subr.mxu0 %v35
    %217 = vmatpush1.msra.mxu0 %v34
    %218 = vmatprep.subr.mxu0 %v37
    %219 = vmatpush1.msra.mxu0 %v36
    %220 = vmatprep.subr.mxu0 %v39
    %221 = vmatpush1.msra.mxu0 %v38
    %222 = vmatprep.subr.mxu0 %v41
    %223 = vmatpush1.msra.mxu0 %v40
    %224 = vmatprep.subr.mxu0 0.0
    %225 = vmatpush1.msra.mxu0 0.0
    %226 = vmatprep.subr.mxu0 0.0
    %227 = vmatpush1.msra.mxu0 0.0
    %228 = vmatprep.subr.mxu0 0.0
    %229 = vmatpush1.msra.mxu0 0.0
    %230 = vmatprep.subr.mxu0 0.0
    %231 = vmatpush1.msra.mxu0 0.0
    %232 = vmatprep.subr.mxu0 0.0
    %233 = vmatpush1.msra.mxu0 0.0
    %234 = vmatprep.subr.mxu0 0.0
    %235 = vmatpush1.msra.mxu0 0.0
    %236 = vmatprep.subr.mxu0 0.0
    %237 = vmatpush1.msra.mxu0 0.0
    %238 = vmatprep.subr.mxu0 0.0
    %239 = vmatpush1.msra.mxu0 0.0
    %240 = vmatprep.subr.mxu0 0.0
    %241 = vmatpush1.msra.mxu0 0.0
    %242 = vmatprep.subr.mxu0 0.0
    %243 = vmatpush1.msra.mxu0 0.0
    %244 = vmatprep.subr.mxu0 0.0
    %245 = vmatpush1.msra.mxu0 0.0
    %246 = vmatprep.subr.mxu0 0.0
    %247 = vmatpush1.msra.mxu0 0.0
    %248 = vmatprep.subr.mxu0 0.0
    %249 = vmatpush1.msra.mxu0 0.0
    %250 = vmatprep.subr.mxu0 0.0
    %251 = vmatpush1.msra.mxu0 0.0
    %252 = vmatprep.subr.mxu0 0.0
    %253 = vmatpush1.msra.mxu0 0.0
    %254 = vmatprep.subr.mxu0 0.0
    %255 = vmatpush1.msra.mxu0 0.0
    %256 = vmatprep.subr.mxu0 0.0
    %257 = vmatpush1.msra.mxu0 0.0
    %258 = vmatprep.subr.mxu0 0.0
    %259 = vmatpush1.msra.mxu0 0.0
    %260 = vmatprep.subr.mxu0 0.0
    %261 = vmatpush1.msra.mxu0 0.0
    %262 = vmatprep.subr.mxu0 0.0
    %263 = vmatpush1.msra.mxu0 0.0
    %264 = vmatprep.subr.mxu0 0.0
    %265 = vmatpush1.msra.mxu0 0.0
    %266 = vmatprep.subr.mxu0 0.0
    %267 = vmatpush1.msra.mxu0 0.0
    %268 = vmatprep.subr.mxu0 0.0
    %269 = vmatpush1.msra.mxu0 0.0
    %270 = vmatprep.subr.mxu0 0.0
    %271 = vmatpush1.msra.mxu0 0.0
    %272 = vmatprep.mubr.f32.mxu0 0.0
    %273 = vmatmul.mubr.f32.gmra.mrb[0].mxu0 %v206
    %v274 = vpop.f32.mrb[0].mxu0
    %v275 = vadd.f32 0.0, %v274
    %v276 = vpop.f32.mrb[0].mxu0
    %v277 = vadd.f32 0.0, %v276
    %278 = vdwg.mxu0
    %v279 = vld [vmem:[#allocation2] sm:$0xff]
    %v280 = vadd.f32 %v279, %v275
    %v281 = vxor.u32 %v280, 2147483648
    %v282 = vmul.f32 %v281, 1.442695
    %v283 = vpow.pop %v282
    %v284 = vadd.f32 %v283, 1.0
    %v285 = vrcp.pop %v284
    %v286 = vmul.f32 1.0, %v285
    %v287 = vtanh.pop %v280
    %v288 = vmul.f32 %v286, 0.0
    %290 = vrot.lane.b32.xlu0 %v287, 64
    %v291 = vpop.permute.xlu0 %290
    %v293 = vmul.f32 %v286, %v291
    %295 = vrot.lane.b32.xlu0 %v293, 32
    %v296 = vpop.permute.xlu0 %295
    %v298 = vadd.f32 %v288, %v296
    %v299 = vtanh.pop %v298
    %301 = vrot.lane.b32.xlu0 %v299, 64
    %v302 = vpop.permute.xlu0 %301
    %v304 = vmul.f32 %v286, %v302
    %306 = vrot.lane.b32.xlu0 %v304, 32
    %v307 = vpop.permute.xlu0 %306
    %vm308 = vcmask 261120
    %v309 = vsel %vm308, %v307, 0
    %311 = vmatprep.subr.mxu0 0.0
    %312 = vmatpush1.msra.mxu0 %v44
    %313 = vmatprep.subr.mxu0 0.0
    %314 = vmatpush1.msra.mxu0 %v45
    %315 = vmatprep.subr.mxu0 0.0
    %316 = vmatpush1.msra.mxu0 %v46
    %317 = vmatprep.subr.mxu0 0.0
    %318 = vmatpush1.msra.mxu0 %v47
    %319 = vmatprep.subr.mxu0 0.0
    %320 = vmatpush1.msra.mxu0 0.0
    %321 = vmatprep.subr.mxu0 0.0
    %322 = vmatpush1.msra.mxu0 0.0
    %323 = vmatprep.subr.mxu0 0.0
    %324 = vmatpush1.msra.mxu0 0.0
    %325 = vmatprep.subr.mxu0 0.0
    %326 = vmatpush1.msra.mxu0 0.0
    %327 = vmatprep.subr.mxu0 0.0
    %328 = vmatpush1.msra.mxu0 0.0
    %329 = vmatprep.subr.mxu0 0.0
    %330 = vmatpush1.msra.mxu0 0.0
    %331 = vmatprep.subr.mxu0 0.0
    %332 = vmatpush1.msra.mxu0 0.0
    %333 = vmatprep.subr.mxu0 0.0
    %334 = vmatpush1.msra.mxu0 0.0
    %335 = vmatprep.subr.mxu0 0.0
    %336 = vmatpush1.msra.mxu0 0.0
    %337 = vmatprep.subr.mxu0 0.0
    %338 = vmatpush1.msra.mxu0 0.0
    %339 = vmatprep.subr.mxu0 0.0
    %340 = vmatpush1.msra.mxu0 0.0
    %341 = vmatprep.subr.mxu0 0.0
    %342 = vmatpush1.msra.mxu0 0.0
    %343 = vmatprep.subr.mxu0 0.0
    %344 = vmatpush1.msra.mxu0 0.0
    %345 = vmatprep.subr.mxu0 0.0
    %346 = vmatpush1.msra.mxu0 0.0
    %347 = vmatprep.subr.mxu0 0.0
    %348 = vmatpush1.msra.mxu0 0.0
    %349 = vmatprep.subr.mxu0 0.0
    %350 = vmatpush1.msra.mxu0 0.0
    %351 = vmatprep.subr.mxu0 0.0
    %352 = vmatpush1.msra.mxu0 0.0
    %353 = vmatprep.subr.mxu0 0.0
    %354 = vmatpush1.msra.mxu0 0.0
    %355 = vmatprep.subr.mxu0 0.0
    %356 = vmatpush1.msra.mxu0 0.0
    %357 = vmatprep.subr.mxu0 0.0
    %358 = vmatpush1.msra.mxu0 0.0
    %359 = vmatprep.subr.mxu0 0.0
    %360 = vmatpush1.msra.mxu0 0.0
    %361 = vmatprep.subr.mxu0 0.0
    %362 = vmatpush1.msra.mxu0 0.0
    %363 = vmatprep.subr.mxu0 0.0
    %364 = vmatpush1.msra.mxu0 0.0
    %365 = vmatprep.subr.mxu0 0.0
    %366 = vmatpush1.msra.mxu0 0.0
    %367 = vmatprep.subr.mxu0 0.0
    %368 = vmatpush1.msra.mxu0 0.0
    %369 = vmatprep.subr.mxu0 0.0
    %370 = vmatpush1.msra.mxu0 0.0
    %371 = vmatprep.subr.mxu0 0.0
    %372 = vmatpush1.msra.mxu0 0.0
    %373 = vmatprep.subr.mxu0 0.0
    %374 = vmatpush1.msra.mxu0 0.0
    %375 = vmatprep.mubr.f32.mxu0 0.0
    %376 = vmatmul.mubr.f32.gmra.mrb[0].mxu0 %v309
    %v377 = vpop.f32.mrb[0].mxu0
    %v378 = vadd.f32 %v277, %v377
    %v379 = vpop.f32.mrb[0].mxu0
    %380 = vdwg.mxu0
    %v381 = vadd.f32 %v378, %v48
    %v382 = vxor.u32 %v381, 2147483648
    %v383 = vmul.f32 %v382, 1.442695
    %v384 = vpow.pop %v383
    %v385 = vadd.f32 %v384, 1.0
    %v386 = vrcp.pop %v385
    %v387 = vmul.f32 1.0, %v386
    %v388 = vtanh.pop %v381
    %v389 = vmul.f32 %v387, 0.0
    %391 = vrot.lane.b32.xlu0 %v388, 64
    %v392 = vpop.permute.xlu0 %391
    %v394 = vmul.f32 %v387, %v392
    %396 = vrot.lane.b32.xlu0 %v394, 32
    %v397 = vpop.permute.xlu0 %396
    %v399 = vadd.f32 %v389, %v397
    %v400 = vtanh.pop %v399
    %402 = vrot.lane.b32.xlu0 %v400, 64
    %v403 = vpop.permute.xlu0 %402
    %v405 = vmul.f32 %v387, %v403
    %408 = vrot.lane.b32.xlu0 %v405, 64
    %v409 = vpop.permute.xlu0 %408
    %v411 = vsel %vm308, %v307, %v409
    %v413 = vsel %vm204, %v411, 0
    %415 = vmatprep.subr.mxu0 %v27
    %416 = vmatpush1.msra.mxu0 %v26
    %417 = vmatprep.subr.mxu0 %v29
    %418 = vmatpush1.msra.mxu0 %v28
    %419 = vmatprep.subr.mxu0 %v31
    %420 = vmatpush1.msra.mxu0 %v30
    %421 = vmatprep.subr.mxu0 %v33
    %422 = vmatpush1.msra.mxu0 %v32
    %423 = vmatprep.subr.mxu0 %v35
    %424 = vmatpush1.msra.mxu0 %v34
    %425 = vmatprep.subr.mxu0 %v37
    %426 = vmatpush1.msra.mxu0 %v36
    %427 = vmatprep.subr.mxu0 %v39
    %428 = vmatpush1.msra.mxu0 %v38
    %429 = vmatprep.subr.mxu0 %v41
    %430 = vmatpush1.msra.mxu0 %v40
    %431 = vmatprep.subr.mxu0 0.0
    %432 = vmatpush1.msra.mxu0 0.0
    %433 = vmatprep.subr.mxu0 0.0
    %434 = vmatpush1.msra.mxu0 0.0
    %435 = vmatprep.subr.mxu0 0.0
    %436 = vmatpush1.msra.mxu0 0.0
    %437 = vmatprep.subr.mxu0 0.0
    %438 = vmatpush1.msra.mxu0 0.0
    %439 = vmatprep.subr.mxu0 0.0
    %440 = vmatpush1.msra.mxu0 0.0
    %441 = vmatprep.subr.mxu0 0.0
    %442 = vmatpush1.msra.mxu0 0.0
    %443 = vmatprep.subr.mxu0 0.0
    %444 = vmatpush1.msra.mxu0 0.0
    %445 = vmatprep.subr.mxu0 0.0
    %446 = vmatpush1.msra.mxu0 0.0
    %447 = vmatprep.subr.mxu0 0.0
    %448 = vmatpush1.msra.mxu0 0.0
    %449 = vmatprep.subr.mxu0 0.0
    %450 = vmatpush1.msra.mxu0 0.0
    %451 = vmatprep.subr.mxu0 0.0
    %452 = vmatpush1.msra.mxu0 0.0
    %453 = vmatprep.subr.mxu0 0.0
    %454 = vmatpush1.msra.mxu0 0.0
    %455 = vmatprep.subr.mxu0 0.0
    %456 = vmatpush1.msra.mxu0 0.0
    %457 = vmatprep.subr.mxu0 0.0
    %458 = vmatpush1.msra.mxu0 0.0
    %459 = vmatprep.subr.mxu0 0.0
    %460 = vmatpush1.msra.mxu0 0.0
    %461 = vmatprep.subr.mxu0 0.0
    %462 = vmatpush1.msra.mxu0 0.0
    %463 = vmatprep.subr.mxu0 0.0
    %464 = vmatpush1.msra.mxu0 0.0
    %465 = vmatprep.subr.mxu0 0.0
    %466 = vmatpush1.msra.mxu0 0.0
    %467 = vmatprep.subr.mxu0 0.0
    %468 = vmatpush1.msra.mxu0 0.0
    %469 = vmatprep.subr.mxu0 0.0
    %470 = vmatpush1.msra.mxu0 0.0
    %471 = vmatprep.subr.mxu0 0.0
    %472 = vmatpush1.msra.mxu0 0.0
    %473 = vmatprep.subr.mxu0 0.0
    %474 = vmatpush1.msra.mxu0 0.0
    %475 = vmatprep.subr.mxu0 0.0
    %476 = vmatpush1.msra.mxu0 0.0
    %477 = vmatprep.subr.mxu0 0.0
    %478 = vmatpush1.msra.mxu0 0.0
    %479 = vmatprep.mubr.f32.mxu0 0.0
    %480 = vmatmul.mubr.f32.gmra.mrb[0].mxu0 %v413
    %v481 = vpop.f32.mrb[0].mxu0
    %v482 = vadd.f32 0.0, %v481
    %v483 = vpop.f32.mrb[0].mxu0
    %v484 = vadd.f32 0.0, %v483
    %485 = vdwg.mxu0
    %v486 = vld [vmem:[#allocation2 + $0x8] sm:$0xff]
    %v487 = vadd.f32 %v486, %v482
    %v488 = vxor.u32 %v487, 2147483648
    %v489 = vmul.f32 %v488, 1.442695
    %v490 = vpow.pop %v489
    %v491 = vadd.f32 %v490, 1.0
    %v492 = vrcp.pop %v491
    %v493 = vmul.f32 1.0, %v492
    %v494 = vtanh.pop %v487
    %v495 = vmul.f32 %v493, %v298
    %497 = vrot.lane.b32.xlu0 %v494, 64
    %v498 = vpop.permute.xlu0 %497
    %v500 = vmul.f32 %v493, %v498
    %502 = vrot.lane.b32.xlu0 %v500, 32
    %v503 = vpop.permute.xlu0 %502
    %v505 = vadd.f32 %v495, %v503
    %v506 = vtanh.pop %v505
    %508 = vrot.lane.b32.xlu0 %v506, 64
    %v509 = vpop.permute.xlu0 %508
    %v511 = vmul.f32 %v493, %v509
    %513 = vrot.lane.b32.xlu0 %v511, 32
    %v514 = vpop.permute.xlu0 %513
    %v515 = vsel %vm308, %v514, 0
    %517 = vmatprep.subr.mxu0 0.0
    %518 = vmatpush1.msra.mxu0 %v44
    %519 = vmatprep.subr.mxu0 0.0
    %520 = vmatpush1.msra.mxu0 %v45
    %521 = vmatprep.subr.mxu0 0.0
    %522 = vmatpush1.msra.mxu0 %v46
    %523 = vmatprep.subr.mxu0 0.0
    %524 = vmatpush1.msra.mxu0 %v47
    %525 = vmatprep.subr.mxu0 0.0
    %526 = vmatpush1.msra.mxu0 0.0
    %527 = vmatprep.subr.mxu0 0.0
    %528 = vmatpush1.msra.mxu0 0.0
    %529 = vmatprep.subr.mxu0 0.0
    %530 = vmatpush1.msra.mxu0 0.0
    %531 = vmatprep.subr.mxu0 0.0
    %532 = vmatpush1.msra.mxu0 0.0
    %533 = vmatprep.subr.mxu0 0.0
    %534 = vmatpush1.msra.mxu0 0.0
    %535 = vmatprep.subr.mxu0 0.0
    %536 = vmatpush1.msra.mxu0 0.0
    %537 = vmatprep.subr.mxu0 0.0
    %538 = vmatpush1.msra.mxu0 0.0
    %539 = vmatprep.subr.mxu0 0.0
    %540 = vmatpush1.msra.mxu0 0.0
    %541 = vmatprep.subr.mxu0 0.0
    %542 = vmatpush1.msra.mxu0 0.0
    %543 = vmatprep.subr.mxu0 0.0
    %544 = vmatpush1.msra.mxu0 0.0
    %545 = vmatprep.subr.mxu0 0.0
    %546 = vmatpush1.msra.mxu0 0.0
    %547 = vmatprep.subr.mxu0 0.0
    %548 = vmatpush1.msra.mxu0 0.0
    %549 = vmatprep.subr.mxu0 0.0
    %550 = vmatpush1.msra.mxu0 0.0
    %551 = vmatprep.subr.mxu0 0.0
    %552 = vmatpush1.msra.mxu0 0.0
    %553 = vmatprep.subr.mxu0 0.0
    %554 = vmatpush1.msra.mxu0 0.0
    %555 = vmatprep.subr.mxu0 0.0
    %556 = vmatpush1.msra.mxu0 0.0
    %557 = vmatprep.subr.mxu0 0.0
    %558 = vmatpush1.msra.mxu0 0.0
    %559 = vmatprep.subr.mxu0 0.0
    %560 = vmatpush1.msra.mxu0 0.0
    %561 = vmatprep.subr.mxu0 0.0
    %562 = vmatpush1.msra.mxu0 0.0
    %563 = vmatprep.subr.mxu0 0.0
    %564 = vmatpush1.msra.mxu0 0.0
    %565 = vmatprep.subr.mxu0 0.0
    %566 = vmatpush1.msra.mxu0 0.0
    %567 = vmatprep.subr.mxu0 0.0
    %568 = vmatpush1.msra.mxu0 0.0
    %569 = vmatprep.subr.mxu0 0.0
    %570 = vmatpush1.msra.mxu0 0.0
    %571 = vmatprep.subr.mxu0 0.0
    %572 = vmatpush1.msra.mxu0 0.0
    %573 = vmatprep.subr.mxu0 0.0
    %574 = vmatpush1.msra.mxu0 0.0
    %575 = vmatprep.subr.mxu0 0.0
    %576 = vmatpush1.msra.mxu0 0.0
    %577 = vmatprep.subr.mxu0 0.0
    %578 = vmatpush1.msra.mxu0 0.0
    %579 = vmatprep.subr.mxu0 0.0
    %580 = vmatpush1.msra.mxu0 0.0
    %581 = vmatprep.mubr.f32.mxu0 0.0
    %582 = vmatmul.mubr.f32.gmra.mrb[0].mxu0 %v515
    %v583 = vpop.f32.mrb[0].mxu0
    %v584 = vadd.f32 %v484, %v583
    %v585 = vpop.f32.mrb[0].mxu0
    %586 = vdwg.mxu0
    %v587 = vadd.f32 %v584, %v48
    %v588 = vxor.u32 %v587, 2147483648
    %v589 = vmul.f32 %v588, 1.442695
    %v590 = vpow.pop %v589
    %v591 = vadd.f32 %v590, 1.0
    %v592 = vrcp.pop %v591
    %v593 = vmul.f32 1.0, %v592
    %v594 = vtanh.pop %v587
    %v595 = vmul.f32 %v593, %v399
    %597 = vrot.lane.b32.xlu0 %v594, 64
    %v598 = vpop.permute.xlu0 %597
    %v600 = vmul.f32 %v593, %v598
    %602 = vrot.lane.b32.xlu0 %v600, 32
    %v603 = vpop.permute.xlu0 %602
    %v605 = vadd.f32 %v595, %v603
    %v606 = vtanh.pop %v605
    %608 = vrot.lane.b32.xlu0 %v606, 64
    %v609 = vpop.permute.xlu0 %608
    %v611 = vmul.f32 %v593, %v609
    %614 = vrot.lane.b32.xlu0 %v611, 64
    %v615 = vpop.permute.xlu0 %614
    %v617 = vsel %vm308, %v514, %v615
    %v619 = vsel %vm204, %v617, 0
    %621 = vmatprep.subr.mxu0 %v27
    %622 = vmatpush1.msra.mxu0 %v26
    %623 = vmatprep.subr.mxu0 %v29
    %624 = vmatpush1.msra.mxu0 %v28
    %625 = vmatprep.subr.mxu0 %v31
    %626 = vmatpush1.msra.mxu0 %v30
    %627 = vmatprep.subr.mxu0 %v33
    %628 = vmatpush1.msra.mxu0 %v32
    %629 = vmatprep.subr.mxu0 %v35
    %630 = vmatpush1.msra.mxu0 %v34
    %631 = vmatprep.subr.mxu0 %v37
    %632 = vmatpush1.msra.mxu0 %v36
    %633 = vmatprep.subr.mxu0 %v39
    %634 = vmatpush1.msra.mxu0 %v38
    %635 = vmatprep.subr.mxu0 %v41
    %636 = vmatpush1.msra.mxu0 %v40
    %637 = vmatprep.subr.mxu0 0.0
    %638 = vmatpush1.msra.mxu0 0.0
    %639 = vmatprep.subr.mxu0 0.0
    %640 = vmatpush1.msra.mxu0 0.0
    %641 = vmatprep.subr.mxu0 0.0
    %642 = vmatpush1.msra.mxu0 0.0
    %643 = vmatprep.subr.mxu0 0.0
    %644 = vmatpush1.msra.mxu0 0.0
    %645 = vmatprep.subr.mxu0 0.0
    %646 = vmatpush1.msra.mxu0 0.0
    %647 = vmatprep.subr.mxu0 0.0
    %648 = vmatpush1.msra.mxu0 0.0
    %649 = vmatprep.subr.mxu0 0.0
    %650 = vmatpush1.msra.mxu0 0.0
    %651 = vmatprep.subr.mxu0 0.0
    %652 = vmatpush1.msra.mxu0 0.0
    %653 = vmatprep.subr.mxu0 0.0
    %654 = vmatpush1.msra.mxu0 0.0
    %655 = vmatprep.subr.mxu0 0.0
    %656 = vmatpush1.msra.mxu0 0.0
    %657 = vmatprep.subr.mxu0 0.0
    %658 = vmatpush1.msra.mxu0 0.0
    %659 = vmatprep.subr.mxu0 0.0
    %660 = vmatpush1.msra.mxu0 0.0
    %661 = vmatprep.subr.mxu0 0.0
    %662 = vmatpush1.msra.mxu0 0.0
    %663 = vmatprep.subr.mxu0 0.0
    %664 = vmatpush1.msra.mxu0 0.0
    %665 = vmatprep.subr.mxu0 0.0
    %666 = vmatpush1.msra.mxu0 0.0
    %667 = vmatprep.subr.mxu0 0.0
    %668 = vmatpush1.msra.mxu0 0.0
    %669 = vmatprep.subr.mxu0 0.0
    %670 = vmatpush1.msra.mxu0 0.0
    %671 = vmatprep.subr.mxu0 0.0
    %672 = vmatpush1.msra.mxu0 0.0
    %673 = vmatprep.subr.mxu0 0.0
    %674 = vmatpush1.msra.mxu0 0.0
    %675 = vmatprep.subr.mxu0 0.0
    %676 = vmatpush1.msra.mxu0 0.0
    %677 = vmatprep.subr.mxu0 0.0
    %678 = vmatpush1.msra.mxu0 0.0
    %679 = vmatprep.subr.mxu0 0.0
    %680 = vmatpush1.msra.mxu0 0.0
    %681 = vmatprep.subr.mxu0 0.0
    %682 = vmatpush1.msra.mxu0 0.0
    %683 = vmatprep.subr.mxu0 0.0
    %684 = vmatpush1.msra.mxu0 0.0
    %685 = vmatprep.mubr.f32.mxu0 0.0
    %686 = vmatmul.mubr.f32.gmra.mrb[0].mxu0 %v619
    %v687 = vpop.f32.mrb[0].mxu0
    %v688 = vadd.f32 0.0, %v687
    %v689 = vpop.f32.mrb[0].mxu0
    %v690 = vadd.f32 0.0, %v689
    %691 = vdwg.mxu0
    %v692 = vld [vmem:[#allocation2 + $0x10] sm:$0xff]
    %v693 = vadd.f32 %v692, %v688
    %v694 = vxor.u32 %v693, 2147483648
    %v695 = vmul.f32 %v694, 1.442695
    %v696 = vpow.pop %v695
    %v697 = vadd.f32 %v696, 1.0
    %v698 = vrcp.pop %v697
    %v699 = vmul.f32 1.0, %v698
    %v700 = vtanh.pop %v693
    %v701 = vmul.f32 %v699, %v505
    %703 = vrot.lane.b32.xlu0 %v700, 64
    %v704 = vpop.permute.xlu0 %703
    %v706 = vmul.f32 %v699, %v704
    %708 = vrot.lane.b32.xlu0 %v706, 32
    %v709 = vpop.permute.xlu0 %708
    %v711 = vadd.f32 %v701, %v709
    %v712 = vtanh.pop %v711
    %714 = vrot.lane.b32.xlu0 %v712, 64
    %v715 = vpop.permute.xlu0 %714
    %v717 = vmul.f32 %v699, %v715
    %719 = vrot.lane.b32.xlu0 %v717, 32
    %v720 = vpop.permute.xlu0 %719
    %v721 = vsel %vm308, %v720, 0
    %723 = vmatprep.subr.mxu0 0.0
    %724 = vmatpush1.msra.mxu0 %v44
    %725 = vmatprep.subr.mxu0 0.0
    %726 = vmatpush1.msra.mxu0 %v45
    %727 = vmatprep.subr.mxu0 0.0
    %728 = vmatpush1.msra.mxu0 %v46
    %729 = vmatprep.subr.mxu0 0.0
    %730 = vmatpush1.msra.mxu0 %v47
    %731 = vmatprep.subr.mxu0 0.0
    %732 = vmatpush1.msra.mxu0 0.0
    %733 = vmatprep.subr.mxu0 0.0
    %734 = vmatpush1.msra.mxu0 0.0
    %735 = vmatprep.subr.mxu0 0.0
    %736 = vmatpush1.msra.mxu0 0.0
    %737 = vmatprep.subr.mxu0 0.0
    %738 = vmatpush1.msra.mxu0 0.0
    %739 = vmatprep.subr.mxu0 0.0
    %740 = vmatpush1.msra.mxu0 0.0
    %741 = vmatprep.subr.mxu0 0.0
    %742 = vmatpush1.msra.mxu0 0.0
    %743 = vmatprep.subr.mxu0 0.0
    %744 = vmatpush1.msra.mxu0 0.0
    %745 = vmatprep.subr.mxu0 0.0
    %746 = vmatpush1.msra.mxu0 0.0
    %747 = vmatprep.subr.mxu0 0.0
    %748 = vmatpush1.msra.mxu0 0.0
    %749 = vmatprep.subr.mxu0 0.0
    %750 = vmatpush1.msra.mxu0 0.0
    %751 = vmatprep.subr.mxu0 0.0
    %752 = vmatpush1.msra.mxu0 0.0
    %753 = vmatprep.subr.mxu0 0.0
    %754 = vmatpush1.msra.mxu0 0.0
    %755 = vmatprep.subr.mxu0 0.0
    %756 = vmatpush1.msra.mxu0 0.0
    %757 = vmatprep.subr.mxu0 0.0
    %758 = vmatpush1.msra.mxu0 0.0
    %759 = vmatprep.subr.mxu0 0.0
    %760 = vmatpush1.msra.mxu0 0.0
    %761 = vmatprep.subr.mxu0 0.0
    %762 = vmatpush1.msra.mxu0 0.0
    %763 = vmatprep.subr.mxu0 0.0
    %764 = vmatpush1.msra.mxu0 0.0
    %765 = vmatprep.subr.mxu0 0.0
    %766 = vmatpush1.msra.mxu0 0.0
    %767 = vmatprep.subr.mxu0 0.0
    %768 = vmatpush1.msra.mxu0 0.0
    %769 = vmatprep.subr.mxu0 0.0
    %770 = vmatpush1.msra.mxu0 0.0
    %771 = vmatprep.subr.mxu0 0.0
    %772 = vmatpush1.msra.mxu0 0.0
    %773 = vmatprep.subr.mxu0 0.0
    %774 = vmatpush1.msra.mxu0 0.0
    %775 = vmatprep.subr.mxu0 0.0
    %776 = vmatpush1.msra.mxu0 0.0
    %777 = vmatprep.subr.mxu0 0.0
    %778 = vmatpush1.msra.mxu0 0.0
    %779 = vmatprep.subr.mxu0 0.0
    %780 = vmatpush1.msra.mxu0 0.0
    %781 = vmatprep.subr.mxu0 0.0
    %782 = vmatpush1.msra.mxu0 0.0
    %783 = vmatprep.subr.mxu0 0.0
    %784 = vmatpush1.msra.mxu0 0.0
    %785 = vmatprep.subr.mxu0 0.0
    %786 = vmatpush1.msra.mxu0 0.0
    %787 = vmatprep.mubr.f32.mxu0 0.0
    %788 = vmatmul.mubr.f32.gmra.mrb[0].mxu0 %v721
    %v789 = vpop.f32.mrb[0].mxu0
    %v790 = vadd.f32 %v690, %v789
    %v791 = vpop.f32.mrb[0].mxu0
    %792 = vdwg.mxu0
    %v793 = vadd.f32 %v790, %v48
    %v794 = vxor.u32 %v793, 2147483648
    %v795 = vmul.f32 %v794, 1.442695
    %v796 = vpow.pop %v795
    %v797 = vadd.f32 %v796, 1.0
    %v798 = vrcp.pop %v797
    %v799 = vmul.f32 1.0, %v798
    %v800 = vtanh.pop %v793
    %v801 = vmul.f32 %v799, %v605
    %803 = vrot.lane.b32.xlu0 %v800, 64
    %v804 = vpop.permute.xlu0 %803
    %v806 = vmul.f32 %v799, %v804
    %808 = vrot.lane.b32.xlu0 %v806, 32
    %v809 = vpop.permute.xlu0 %808
    %v811 = vadd.f32 %v801, %v809
    %v812 = vtanh.pop %v811
    %814 = vrot.lane.b32.xlu0 %v812, 64
    %v815 = vpop.permute.xlu0 %814
    %v817 = vmul.f32 %v799, %v815
    %820 = vrot.lane.b32.xlu0 %v817, 64
    %v821 = vpop.permute.xlu0 %820
    %v823 = vsel %vm308, %v720, %v821
    %v825 = vsel %vm204, %v823, 0
    %827 = vmatprep.subr.mxu0 %v27
    %828 = vmatpush1.msra.mxu0 %v26
    %829 = vmatprep.subr.mxu0 %v29
    %830 = vmatpush1.msra.mxu0 %v28
    %831 = vmatprep.subr.mxu0 %v31
    %832 = vmatpush1.msra.mxu0 %v30
    %833 = vmatprep.subr.mxu0 %v33
    %834 = vmatpush1.msra.mxu0 %v32
    %835 = vmatprep.subr.mxu0 %v35
    %836 = vmatpush1.msra.mxu0 %v34
    %837 = vmatprep.subr.mxu0 %v37
    %838 = vmatpush1.msra.mxu0 %v36
    %839 = vmatprep.subr.mxu0 %v39
    %840 = vmatpush1.msra.mxu0 %v38
    %841 = vmatprep.subr.mxu0 %v41
    %842 = vmatpush1.msra.mxu0 %v40
    %843 = vmatprep.subr.mxu0 0.0
    %844 = vmatpush1.msra.mxu0 0.0
    %845 = vmatprep.subr.mxu0 0.0
    %846 = vmatpush1.msra.mxu0 0.0
    %847 = vmatprep.subr.mxu0 0.0
    %848 = vmatpush1.msra.mxu0 0.0
    %849 = vmatprep.subr.mxu0 0.0
    %850 = vmatpush1.msra.mxu0 0.0
    %851 = vmatprep.subr.mxu0 0.0
    %852 = vmatpush1.msra.mxu0 0.0
    %853 = vmatprep.subr.mxu0 0.0
    %854 = vmatpush1.msra.mxu0 0.0
    %855 = vmatprep.subr.mxu0 0.0
    %856 = vmatpush1.msra.mxu0 0.0
    %857 = vmatprep.subr.mxu0 0.0
    %858 = vmatpush1.msra.mxu0 0.0
    %859 = vmatprep.subr.mxu0 0.0
    %860 = vmatpush1.msra.mxu0 0.0
    %861 = vmatprep.subr.mxu0 0.0
    %862 = vmatpush1.msra.mxu0 0.0
    %863 = vmatprep.subr.mxu0 0.0
    %864 = vmatpush1.msra.mxu0 0.0
    %865 = vmatprep.subr.mxu0 0.0
    %866 = vmatpush1.msra.mxu0 0.0
    %867 = vmatprep.subr.mxu0 0.0
    %868 = vmatpush1.msra.mxu0 0.0
    %869 = vmatprep.subr.mxu0 0.0
    %870 = vmatpush1.msra.mxu0 0.0
    %871 = vmatprep.subr.mxu0 0.0
    %872 = vmatpush1.msra.mxu0 0.0
    %873 = vmatprep.subr.mxu0 0.0
    %874 = vmatpush1.msra.mxu0 0.0
    %875 = vmatprep.subr.mxu0 0.0
    %876 = vmatpush1.msra.mxu0 0.0
    %877 = vmatprep.subr.mxu0 0.0
    %878 = vmatpush1.msra.mxu0 0.0
    %879 = vmatprep.subr.mxu0 0.0
    %880 = vmatpush1.msra.mxu0 0.0
    %881 = vmatprep.subr.mxu0 0.0
    %882 = vmatpush1.msra.mxu0 0.0
    %883 = vmatprep.subr.mxu0 0.0
    %884 = vmatpush1.msra.mxu0 0.0
    %885 = vmatprep.subr.mxu0 0.0
    %886 = vmatpush1.msra.mxu0 0.0
    %887 = vmatprep.subr.mxu0 0.0
    %888 = vmatpush1.msra.mxu0 0.0
    %889 = vmatprep.subr.mxu0 0.0
    %890 = vmatpush1.msra.mxu0 0.0
    %891 = vmatprep.mubr.f32.mxu0 0.0
    %892 = vmatmul.mubr.f32.gmra.mrb[0].mxu0 %v825
    %v893 = vpop.f32.mrb[0].mxu0
    %v894 = vadd.f32 0.0, %v893
    %v895 = vpop.f32.mrb[0].mxu0
    %v896 = vadd.f32 0.0, %v895
    %897 = vdwg.mxu0
    %v898 = vld [vmem:[#allocation2 + $0x18] sm:$0xff]
    %v899 = vadd.f32 %v898, %v894
    %v900 = vxor.u32 %v899, 2147483648
    %v901 = vmul.f32 %v900, 1.442695
    %v902 = vpow.pop %v901
    %v903 = vadd.f32 %v902, 1.0
    %v904 = vrcp.pop %v903
    %v905 = vmul.f32 1.0, %v904
    %v906 = vtanh.pop %v899
    %v907 = vmul.f32 %v905, %v711
    %909 = vrot.lane.b32.xlu0 %v906, 64
    %v910 = vpop.permute.xlu0 %909
    %v912 = vmul.f32 %v905, %v910
    %914 = vrot.lane.b32.xlu0 %v912, 32
    %v915 = vpop.permute.xlu0 %914
    %v917 = vadd.f32 %v907, %v915
    %v918 = vtanh.pop %v917
    %920 = vrot.lane.b32.xlu0 %v918, 64
    %v921 = vpop.permute.xlu0 %920
    %v923 = vmul.f32 %v905, %v921
    %925 = vrot.lane.b32.xlu0 %v923, 32
    %v926 = vpop.permute.xlu0 %925
    %v927 = vsel %vm308, %v926, 0
    %929 = vmatprep.subr.mxu0 0.0
    %930 = vmatpush1.msra.mxu0 %v44
    %931 = vmatprep.subr.mxu0 0.0
    %932 = vmatpush1.msra.mxu0 %v45
    %933 = vmatprep.subr.mxu0 0.0
    %934 = vmatpush1.msra.mxu0 %v46
    %935 = vmatprep.subr.mxu0 0.0
    %936 = vmatpush1.msra.mxu0 %v47
    %937 = vmatprep.subr.mxu0 0.0
    %938 = vmatpush1.msra.mxu0 0.0
    %939 = vmatprep.subr.mxu0 0.0
    %940 = vmatpush1.msra.mxu0 0.0
    %941 = vmatprep.subr.mxu0 0.0
    %942 = vmatpush1.msra.mxu0 0.0
    %943 = vmatprep.subr.mxu0 0.0
    %944 = vmatpush1.msra.mxu0 0.0
    %945 = vmatprep.subr.mxu0 0.0
    %946 = vmatpush1.msra.mxu0 0.0
    %947 = vmatprep.subr.mxu0 0.0
    %948 = vmatpush1.msra.mxu0 0.0
    %949 = vmatprep.subr.mxu0 0.0
    %950 = vmatpush1.msra.mxu0 0.0
    %951 = vmatprep.subr.mxu0 0.0
    %952 = vmatpush1.msra.mxu0 0.0
    %953 = vmatprep.subr.mxu0 0.0
    %954 = vmatpush1.msra.mxu0 0.0
    %955 = vmatprep.subr.mxu0 0.0
    %956 = vmatpush1.msra.mxu0 0.0
    %957 = vmatprep.subr.mxu0 0.0
    %958 = vmatpush1.msra.mxu0 0.0
    %959 = vmatprep.subr.mxu0 0.0
    %960 = vmatpush1.msra.mxu0 0.0
    %961 = vmatprep.subr.mxu0 0.0
    %962 = vmatpush1.msra.mxu0 0.0
    %963 = vmatprep.subr.mxu0 0.0
    %964 = vmatpush1.msra.mxu0 0.0
    %965 = vmatprep.subr.mxu0 0.0
    %966 = vmatpush1.msra.mxu0 0.0
    %967 = vmatprep.subr.mxu0 0.0
    %968 = vmatpush1.msra.mxu0 0.0
    %969 = vmatprep.subr.mxu0 0.0
    %970 = vmatpush1.msra.mxu0 0.0
    %971 = vmatprep.subr.mxu0 0.0
    %972 = vmatpush1.msra.mxu0 0.0
    %973 = vmatprep.subr.mxu0 0.0
    %974 = vmatpush1.msra.mxu0 0.0
    %975 = vmatprep.subr.mxu0 0.0
    %976 = vmatpush1.msra.mxu0 0.0
    %977 = vmatprep.subr.mxu0 0.0
    %978 = vmatpush1.msra.mxu0 0.0
    %979 = vmatprep.subr.mxu0 0.0
    %980 = vmatpush1.msra.mxu0 0.0
    %981 = vmatprep.subr.mxu0 0.0
    %982 = vmatpush1.msra.mxu0 0.0
    %983 = vmatprep.subr.mxu0 0.0
    %984 = vmatpush1.msra.mxu0 0.0
    %985 = vmatprep.subr.mxu0 0.0
    %986 = vmatpush1.msra.mxu0 0.0
    %987 = vmatprep.subr.mxu0 0.0
    %988 = vmatpush1.msra.mxu0 0.0
    %989 = vmatprep.subr.mxu0 0.0
    %990 = vmatpush1.msra.mxu0 0.0
    %991 = vmatprep.subr.mxu0 0.0
    %992 = vmatpush1.msra.mxu0 0.0
    %993 = vmatprep.mubr.f32.mxu0 0.0
    %994 = vmatmul.mubr.f32.gmra.mrb[0].mxu0 %v927
    %v995 = vpop.f32.mrb[0].mxu0
    %v996 = vadd.f32 %v896, %v995
    %v997 = vpop.f32.mrb[0].mxu0
    %998 = vdwg.mxu0
    %v999 = vadd.f32 %v996, %v48
    %v1000 = vxor.u32 %v999, 2147483648
    %v1001 = vmul.f32 %v1000, 1.442695
    %v1002 = vpow.pop %v1001
    %v1003 = vadd.f32 %v1002, 1.0
    %v1004 = vrcp.pop %v1003
    %v1005 = vmul.f32 1.0, %v1004
    %v1006 = vtanh.pop %v999
    %v1007 = vmul.f32 %v1005, %v811
    %1009 = vrot.lane.b32.xlu0 %v1006, 64
    %v1010 = vpop.permute.xlu0 %1009
    %v1012 = vmul.f32 %v1005, %v1010
    %1014 = vrot.lane.b32.xlu0 %v1012, 32
    %v1015 = vpop.permute.xlu0 %1014
    %v1017 = vadd.f32 %v1007, %v1015
    %v1018 = vtanh.pop %v1017
    %1020 = vrot.lane.b32.xlu0 %v1018, 64
    %v1021 = vpop.permute.xlu0 %1020
    %v1023 = vmul.f32 %v1005, %v1021
    %1026 = vrot.lane.b32.xlu0 %v1023, 64
    %v1027 = vpop.permute.xlu0 %1026
    %v1029 = vsel %vm308, %v926, %v1027
    %v1031 = vsel %vm204, %v1029, 0
    %1033 = vmatprep.subr.mxu0 %v27
    %1034 = vmatpush1.msra.mxu0 %v26
    %1035 = vmatprep.subr.mxu0 %v29
    %1036 = vmatpush1.msra.mxu0 %v28
    %1037 = vmatprep.subr.mxu0 %v31
    %1038 = vmatpush1.msra.mxu0 %v30
    %1039 = vmatprep.subr.mxu0 %v33
    %1040 = vmatpush1.msra.mxu0 %v32
    %1041 = vmatprep.subr.mxu0 %v35
    %1042 = vmatpush1.msra.mxu0 %v34
    %1043 = vmatprep.subr.mxu0 %v37
    %1044 = vmatpush1.msra.mxu0 %v36
    %1045 = vmatprep.subr.mxu0 %v39
    %1046 = vmatpush1.msra.mxu0 %v38
    %1047 = vmatprep.subr.mxu0 %v41
    %1048 = vmatpush1.msra.mxu0 %v40
    %1049 = vmatprep.subr.mxu0 0.0
    %1050 = vmatpush1.msra.mxu0 0.0
    %1051 = vmatprep.subr.mxu0 0.0
    %1052 = vmatpush1.msra.mxu0 0.0
    %1053 = vmatprep.subr.mxu0 0.0
    %1054 = vmatpush1.msra.mxu0 0.0
    %1055 = vmatprep.subr.mxu0 0.0
    %1056 = vmatpush1.msra.mxu0 0.0
    %1057 = vmatprep.subr.mxu0 0.0
    %1058 = vmatpush1.msra.mxu0 0.0
    %1059 = vmatprep.subr.mxu0 0.0
    %1060 = vmatpush1.msra.mxu0 0.0
    %1061 = vmatprep.subr.mxu0 0.0
    %1062 = vmatpush1.msra.mxu0 0.0
    %1063 = vmatprep.subr.mxu0 0.0
    %1064 = vmatpush1.msra.mxu0 0.0
    %1065 = vmatprep.subr.mxu0 0.0
    %1066 = vmatpush1.msra.mxu0 0.0
    %1067 = vmatprep.subr.mxu0 0.0
    %1068 = vmatpush1.msra.mxu0 0.0
    %1069 = vmatprep.subr.mxu0 0.0
    %1070 = vmatpush1.msra.mxu0 0.0
    %1071 = vmatprep.subr.mxu0 0.0
    %1072 = vmatpush1.msra.mxu0 0.0
    %1073 = vmatprep.subr.mxu0 0.0
    %1074 = vmatpush1.msra.mxu0 0.0
    %1075 = vmatprep.subr.mxu0 0.0
    %1076 = vmatpush1.msra.mxu0 0.0
    %1077 = vmatprep.subr.mxu0 0.0
    %1078 = vmatpush1.msra.mxu0 0.0
    %1079 = vmatprep.subr.mxu0 0.0
    %1080 = vmatpush1.msra.mxu0 0.0
    %1081 = vmatprep.subr.mxu0 0.0
    %1082 = vmatpush1.msra.mxu0 0.0
    %1083 = vmatprep.subr.mxu0 0.0
    %1084 = vmatpush1.msra.mxu0 0.0
    %1085 = vmatprep.subr.mxu0 0.0
    %1086 = vmatpush1.msra.mxu0 0.0
    %1087 = vmatprep.subr.mxu0 0.0
    %1088 = vmatpush1.msra.mxu0 0.0
    %1089 = vmatprep.subr.mxu0 0.0
    %1090 = vmatpush1.msra.mxu0 0.0
    %1091 = vmatprep.subr.mxu0 0.0
    %1092 = vmatpush1.msra.mxu0 0.0
    %1093 = vmatprep.subr.mxu0 0.0
    %1094 = vmatpush1.msra.mxu0 0.0
    %1095 = vmatprep.subr.mxu0 0.0
    %1096 = vmatpush1.msra.mxu0 0.0
    %1097 = vmatprep.mubr.f32.mxu0 0.0
    %1098 = vmatmul.mubr.f32.gmra.mrb[0].mxu0 %v1031
    %v1099 = vpop.f32.mrb[0].mxu0
    %v1100 = vadd.f32 0.0, %v1099
    %v1101 = vpop.f32.mrb[0].mxu0
    %v1102 = vadd.f32 0.0, %v1101
    %1103 = vdwg.mxu0
    %v1104 = vld [vmem:[#allocation2 + $0x20] sm:$0xff]
    %v1105 = vadd.f32 %v1104, %v1100
    %v1106 = vxor.u32 %v1105, 2147483648
    %v1107 = vmul.f32 %v1106, 1.442695
    %v1108 = vpow.pop %v1107
    %v1109 = vadd.f32 %v1108, 1.0
    %v1110 = vrcp.pop %v1109
    %v1111 = vmul.f32 1.0, %v1110
    %v1112 = vtanh.pop %v1105
    %v1113 = vmul.f32 %v1111, %v917
    %1115 = vrot.lane.b32.xlu0 %v1112, 64
    %v1116 = vpop.permute.xlu0 %1115
    %v1118 = vmul.f32 %v1111, %v1116
    %1120 = vrot.lane.b32.xlu0 %v1118, 32
    %v1121 = vpop.permute.xlu0 %1120
    %v1123 = vadd.f32 %v1113, %v1121
    %v1124 = vtanh.pop %v1123
    %1126 = vrot.lane.b32.xlu0 %v1124, 64
    %v1127 = vpop.permute.xlu0 %1126
    %v1129 = vmul.f32 %v1111, %v1127
    %1131 = vrot.lane.b32.xlu0 %v1129, 32
    %v1132 = vpop.permute.xlu0 %1131
    %v1133 = vsel %vm308, %v1132, 0
    %1135 = vmatprep.subr.mxu0 0.0
    %1136 = vmatpush1.msra.mxu0 %v44
    %1137 = vmatprep.subr.mxu0 0.0
    %1138 = vmatpush1.msra.mxu0 %v45
    %1139 = vmatprep.subr.mxu0 0.0
    %1140 = vmatpush1.msra.mxu0 %v46
    %1141 = vmatprep.subr.mxu0 0.0
    %1142 = vmatpush1.msra.mxu0 %v47
    %1143 = vmatprep.subr.mxu0 0.0
    %1144 = vmatpush1.msra.mxu0 0.0
    %1145 = vmatprep.subr.mxu0 0.0
    %1146 = vmatpush1.msra.mxu0 0.0
    %1147 = vmatprep.subr.mxu0 0.0
    %1148 = vmatpush1.msra.mxu0 0.0
    %1149 = vmatprep.subr.mxu0 0.0
    %1150 = vmatpush1.msra.mxu0 0.0
    %1151 = vmatprep.subr.mxu0 0.0
    %1152 = vmatpush1.msra.mxu0 0.0
    %1153 = vmatprep.subr.mxu0 0.0
    %1154 = vmatpush1.msra.mxu0 0.0
    %1155 = vmatprep.subr.mxu0 0.0
    %1156 = vmatpush1.msra.mxu0 0.0
    %1157 = vmatprep.subr.mxu0 0.0
    %1158 = vmatpush1.msra.mxu0 0.0
    %1159 = vmatprep.subr.mxu0 0.0
    %1160 = vmatpush1.msra.mxu0 0.0
    %1161 = vmatprep.subr.mxu0 0.0
    %1162 = vmatpush1.msra.mxu0 0.0
    %1163 = vmatprep.subr.mxu0 0.0
    %1164 = vmatpush1.msra.mxu0 0.0
    %1165 = vmatprep.subr.mxu0 0.0
    %1166 = vmatpush1.msra.mxu0 0.0
    %1167 = vmatprep.subr.mxu0 0.0
    %1168 = vmatpush1.msra.mxu0 0.0
    %1169 = vmatprep.subr.mxu0 0.0
    %1170 = vmatpush1.msra.mxu0 0.0
    %1171 = vmatprep.subr.mxu0 0.0
    %1172 = vmatpush1.msra.mxu0 0.0
    %1173 = vmatprep.subr.mxu0 0.0
    %1174 = vmatpush1.msra.mxu0 0.0
    %1175 = vmatprep.subr.mxu0 0.0
    %1176 = vmatpush1.msra.mxu0 0.0
    %1177 = vmatprep.subr.mxu0 0.0
    %1178 = vmatpush1.msra.mxu0 0.0
    %1179 = vmatprep.subr.mxu0 0.0
    %1180 = vmatpush1.msra.mxu0 0.0
    %1181 = vmatprep.subr.mxu0 0.0
    %1182 = vmatpush1.msra.mxu0 0.0
    %1183 = vmatprep.subr.mxu0 0.0
    %1184 = vmatpush1.msra.mxu0 0.0
    %1185 = vmatprep.subr.mxu0 0.0
    %1186 = vmatpush1.msra.mxu0 0.0
    %1187 = vmatprep.subr.mxu0 0.0
    %1188 = vmatpush1.msra.mxu0 0.0
    %1189 = vmatprep.subr.mxu0 0.0
    %1190 = vmatpush1.msra.mxu0 0.0
    %1191 = vmatprep.subr.mxu0 0.0
    %1192 = vmatpush1.msra.mxu0 0.0
    %1193 = vmatprep.subr.mxu0 0.0
    %1194 = vmatpush1.msra.mxu0 0.0
    %1195 = vmatprep.subr.mxu0 0.0
    %1196 = vmatpush1.msra.mxu0 0.0
    %1197 = vmatprep.subr.mxu0 0.0
    %1198 = vmatpush1.msra.mxu0 0.0
    %1199 = vmatprep.mubr.f32.mxu0 0.0
    %1200 = vmatmul.mubr.f32.gmra.mrb[0].mxu0 %v1133
    %v1201 = vpop.f32.mrb[0].mxu0
    %v1202 = vadd.f32 %v1102, %v1201
    %v1203 = vpop.f32.mrb[0].mxu0
    %1204 = vdwg.mxu0
    %v1205 = vadd.f32 %v1202, %v48
    %v1206 = vxor.u32 %v1205, 2147483648
    %v1207 = vmul.f32 %v1206, 1.442695
    %v1208 = vpow.pop %v1207
    %v1209 = vadd.f32 %v1208, 1.0
    %v1210 = vrcp.pop %v1209
    %v1211 = vmul.f32 1.0, %v1210
    %v1212 = vtanh.pop %v1205
    %v1213 = vmul.f32 %v1211, %v1017
    %1215 = vrot.lane.b32.xlu0 %v1212, 64
    %v1216 = vpop.permute.xlu0 %1215
    %v1218 = vmul.f32 %v1211, %v1216
    %1220 = vrot.lane.b32.xlu0 %v1218, 32
    %v1221 = vpop.permute.xlu0 %1220
    %v1223 = vadd.f32 %v1213, %v1221
    %v1224 = vtanh.pop %v1223
    %1226 = vrot.lane.b32.xlu0 %v1224, 64
    %v1227 = vpop.permute.xlu0 %1226
    %v1229 = vmul.f32 %v1211, %v1227
    %1232 = vrot.lane.b32.xlu0 %v1229, 64
    %v1233 = vpop.permute.xlu0 %1232
    %v1235 = vsel %vm308, %v1132, %v1233
    %v1237 = vsel %vm204, %v1235, 0
    %1239 = vmatprep.subr.mxu0 %v27
    %1240 = vmatpush1.msra.mxu0 %v26
    %1241 = vmatprep.subr.mxu0 %v29
    %1242 = vmatpush1.msra.mxu0 %v28
    %1243 = vmatprep.subr.mxu0 %v31
    %1244 = vmatpush1.msra.mxu0 %v30
    %1245 = vmatprep.subr.mxu0 %v33
    %1246 = vmatpush1.msra.mxu0 %v32
    %1247 = vmatprep.subr.mxu0 %v35
    %1248 = vmatpush1.msra.mxu0 %v34
    %1249 = vmatprep.subr.mxu0 %v37
    %1250 = vmatpush1.msra.mxu0 %v36
    %1251 = vmatprep.subr.mxu0 %v39
    %1252 = vmatpush1.msra.mxu0 %v38
    %1253 = vmatprep.subr.mxu0 %v41
    %1254 = vmatpush1.msra.mxu0 %v40
    %1255 = vmatprep.subr.mxu0 0.0
    %1256 = vmatpush1.msra.mxu0 0.0
    %1257 = vmatprep.subr.mxu0 0.0
    %1258 = vmatpush1.msra.mxu0 0.0
    %1259 = vmatprep.subr.mxu0 0.0
    %1260 = vmatpush1.msra.mxu0 0.0
    %1261 = vmatprep.subr.mxu0 0.0
    %1262 = vmatpush1.msra.mxu0 0.0
    %1263 = vmatprep.subr.mxu0 0.0
    %1264 = vmatpush1.msra.mxu0 0.0
    %1265 = vmatprep.subr.mxu0 0.0
    %1266 = vmatpush1.msra.mxu0 0.0
    %1267 = vmatprep.subr.mxu0 0.0
    %1268 = vmatpush1.msra.mxu0 0.0
    %1269 = vmatprep.subr.mxu0 0.0
    %1270 = vmatpush1.msra.mxu0 0.0
    %1271 = vmatprep.subr.mxu0 0.0
    %1272 = vmatpush1.msra.mxu0 0.0
    %1273 = vmatprep.subr.mxu0 0.0
    %1274 = vmatpush1.msra.mxu0 0.0
    %1275 = vmatprep.subr.mxu0 0.0
    %1276 = vmatpush1.msra.mxu0 0.0
    %1277 = vmatprep.subr.mxu0 0.0
    %1278 = vmatpush1.msra.mxu0 0.0
    %1279 = vmatprep.subr.mxu0 0.0
    %1280 = vmatpush1.msra.mxu0 0.0
    %1281 = vmatprep.subr.mxu0 0.0
    %1282 = vmatpush1.msra.mxu0 0.0
    %1283 = vmatprep.subr.mxu0 0.0
    %1284 = vmatpush1.msra.mxu0 0.0
    %1285 = vmatprep.subr.mxu0 0.0
    %1286 = vmatpush1.msra.mxu0 0.0
    %1287 = vmatprep.subr.mxu0 0.0
    %1288 = vmatpush1.msra.mxu0 0.0
    %1289 = vmatprep.subr.mxu0 0.0
    %1290 = vmatpush1.msra.mxu0 0.0
    %1291 = vmatprep.subr.mxu0 0.0
    %1292 = vmatpush1.msra.mxu0 0.0
    %1293 = vmatprep.subr.mxu0 0.0
    %1294 = vmatpush1.msra.mxu0 0.0
    %1295 = vmatprep.subr.mxu0 0.0
    %1296 = vmatpush1.msra.mxu0 0.0
    %1297 = vmatprep.subr.mxu0 0.0
    %1298 = vmatpush1.msra.mxu0 0.0
    %1299 = vmatprep.subr.mxu0 0.0
    %1300 = vmatpush1.msra.mxu0 0.0
    %1301 = vmatprep.subr.mxu0 0.0
    %1302 = vmatpush1.msra.mxu0 0.0
    %1303 = vmatprep.mubr.f32.mxu0 0.0
    %1304 = vmatmul.mubr.f32.gmra.mrb[0].mxu0 %v1237
    %v1305 = vpop.f32.mrb[0].mxu0
    %v1306 = vadd.f32 0.0, %v1305
    %v1307 = vpop.f32.mrb[0].mxu0
    %v1308 = vadd.f32 0.0, %v1307
    %1309 = vdwg.mxu0
    %v1310 = vld [vmem:[#allocation2 + $0x28] sm:$0xff]
    %v1311 = vadd.f32 %v1310, %v1306
    %v1312 = vxor.u32 %v1311, 2147483648
    %v1313 = vmul.f32 %v1312, 1.442695
    %v1314 = vpow.pop %v1313
    %v1315 = vadd.f32 %v1314, 1.0
    %v1316 = vrcp.pop %v1315
    %v1317 = vmul.f32 1.0, %v1316
    %v1318 = vtanh.pop %v1311
    %v1319 = vmul.f32 %v1317, %v1123
    %1321 = vrot.lane.b32.xlu0 %v1318, 64
    %v1322 = vpop.permute.xlu0 %1321
    %v1324 = vmul.f32 %v1317, %v1322
    %1326 = vrot.lane.b32.xlu0 %v1324, 32
    %v1327 = vpop.permute.xlu0 %1326
    %v1329 = vadd.f32 %v1319, %v1327
    %v1330 = vtanh.pop %v1329
    %1332 = vrot.lane.b32.xlu0 %v1330, 64
    %v1333 = vpop.permute.xlu0 %1332
    %v1335 = vmul.f32 %v1317, %v1333
    %1337 = vrot.lane.b32.xlu0 %v1335, 32
    %v1338 = vpop.permute.xlu0 %1337
    %v1339 = vsel %vm308, %v1338, 0
    %1341 = vmatprep.subr.mxu0 0.0
    %1342 = vmatpush1.msra.mxu0 %v44
    %1343 = vmatprep.subr.mxu0 0.0
    %1344 = vmatpush1.msra.mxu0 %v45
    %1345 = vmatprep.subr.mxu0 0.0
    %1346 = vmatpush1.msra.mxu0 %v46
    %1347 = vmatprep.subr.mxu0 0.0
    %1348 = vmatpush1.msra.mxu0 %v47
    %1349 = vmatprep.subr.mxu0 0.0
    %1350 = vmatpush1.msra.mxu0 0.0
    %1351 = vmatprep.subr.mxu0 0.0
    %1352 = vmatpush1.msra.mxu0 0.0
    %1353 = vmatprep.subr.mxu0 0.0
    %1354 = vmatpush1.msra.mxu0 0.0
    %1355 = vmatprep.subr.mxu0 0.0
    %1356 = vmatpush1.msra.mxu0 0.0
    %1357 = vmatprep.subr.mxu0 0.0
    %1358 = vmatpush1.msra.mxu0 0.0
    %1359 = vmatprep.subr.mxu0 0.0
    %1360 = vmatpush1.msra.mxu0 0.0
    %1361 = vmatprep.subr.mxu0 0.0
    %1362 = vmatpush1.msra.mxu0 0.0
    %1363 = vmatprep.subr.mxu0 0.0
    %1364 = vmatpush1.msra.mxu0 0.0
    %1365 = vmatprep.subr.mxu0 0.0
    %1366 = vmatpush1.msra.mxu0 0.0
    %1367 = vmatprep.subr.mxu0 0.0
    %1368 = vmatpush1.msra.mxu0 0.0
    %1369 = vmatprep.subr.mxu0 0.0
    %1370 = vmatpush1.msra.mxu0 0.0
    %1371 = vmatprep.subr.mxu0 0.0
    %1372 = vmatpush1.msra.mxu0 0.0
    %1373 = vmatprep.subr.mxu0 0.0
    %1374 = vmatpush1.msra.mxu0 0.0
    %1375 = vmatprep.subr.mxu0 0.0
    %1376 = vmatpush1.msra.mxu0 0.0
    %1377 = vmatprep.subr.mxu0 0.0
    %1378 = vmatpush1.msra.mxu0 0.0
    %1379 = vmatprep.subr.mxu0 0.0
    %1380 = vmatpush1.msra.mxu0 0.0
    %1381 = vmatprep.subr.mxu0 0.0
    %1382 = vmatpush1.msra.mxu0 0.0
    %1383 = vmatprep.subr.mxu0 0.0
    %1384 = vmatpush1.msra.mxu0 0.0
    %1385 = vmatprep.subr.mxu0 0.0
    %1386 = vmatpush1.msra.mxu0 0.0
    %1387 = vmatprep.subr.mxu0 0.0
    %1388 = vmatpush1.msra.mxu0 0.0
    %1389 = vmatprep.subr.mxu0 0.0
    %1390 = vmatpush1.msra.mxu0 0.0
    %1391 = vmatprep.subr.mxu0 0.0
    %1392 = vmatpush1.msra.mxu0 0.0
    %1393 = vmatprep.subr.mxu0 0.0
    %1394 = vmatpush1.msra.mxu0 0.0
    %1395 = vmatprep.subr.mxu0 0.0
    %1396 = vmatpush1.msra.mxu0 0.0
    %1397 = vmatprep.subr.mxu0 0.0
    %1398 = vmatpush1.msra.mxu0 0.0
    %1399 = vmatprep.subr.mxu0 0.0
    %1400 = vmatpush1.msra.mxu0 0.0
    %1401 = vmatprep.subr.mxu0 0.0
    %1402 = vmatpush1.msra.mxu0 0.0
    %1403 = vmatprep.subr.mxu0 0.0
    %1404 = vmatpush1.msra.mxu0 0.0
    %1405 = vmatprep.mubr.f32.mxu0 0.0
    %1406 = vmatmul.mubr.f32.gmra.mrb[0].mxu0 %v1339
    %v1407 = vpop.f32.mrb[0].mxu0
    %v1408 = vadd.f32 %v1308, %v1407
    %v1409 = vpop.f32.mrb[0].mxu0
    %1410 = vdwg.mxu0
    %v1411 = vadd.f32 %v1408, %v48
    %v1412 = vxor.u32 %v1411, 2147483648
    %v1413 = vmul.f32 %v1412, 1.442695
    %v1414 = vpow.pop %v1413
    %v1415 = vadd.f32 %v1414, 1.0
    %v1416 = vrcp.pop %v1415
    %v1417 = vmul.f32 1.0, %v1416
    %v1418 = vtanh.pop %v1411
    %v1419 = vmul.f32 %v1417, %v1223
    %1421 = vrot.lane.b32.xlu0 %v1418, 64
    %v1422 = vpop.permute.xlu0 %1421
    %v1424 = vmul.f32 %v1417, %v1422
    %1426 = vrot.lane.b32.xlu0 %v1424, 32
    %v1427 = vpop.permute.xlu0 %1426
    %v1429 = vadd.f32 %v1419, %v1427
    %v1430 = vtanh.pop %v1429
    %1432 = vrot.lane.b32.xlu0 %v1430, 64
    %v1433 = vpop.permute.xlu0 %1432
    %v1435 = vmul.f32 %v1417, %v1433
    %1438 = vrot.lane.b32.xlu0 %v1435, 64
    %v1439 = vpop.permute.xlu0 %1438
    %v1441 = vsel %vm308, %v1338, %v1439
    %v1443 = vsel %vm204, %v1441, 0
    %1445 = vmatprep.subr.mxu0 %v27
    %1446 = vmatpush1.msra.mxu0 %v26
    %1447 = vmatprep.subr.mxu0 %v29
    %1448 = vmatpush1.msra.mxu0 %v28
    %1449 = vmatprep.subr.mxu0 %v31
    %1450 = vmatpush1.msra.mxu0 %v30
    %1451 = vmatprep.subr.mxu0 %v33
    %1452 = vmatpush1.msra.mxu0 %v32
    %1453 = vmatprep.subr.mxu0 %v35
    %1454 = vmatpush1.msra.mxu0 %v34
    %1455 = vmatprep.subr.mxu0 %v37
    %1456 = vmatpush1.msra.mxu0 %v36
    %1457 = vmatprep.subr.mxu0 %v39
    %1458 = vmatpush1.msra.mxu0 %v38
    %1459 = vmatprep.subr.mxu0 %v41
    %1460 = vmatpush1.msra.mxu0 %v40
    %1461 = vmatprep.subr.mxu0 0.0
    %1462 = vmatpush1.msra.mxu0 0.0
    %1463 = vmatprep.subr.mxu0 0.0
    %1464 = vmatpush1.msra.mxu0 0.0
    %1465 = vmatprep.subr.mxu0 0.0
    %1466 = vmatpush1.msra.mxu0 0.0
    %1467 = vmatprep.subr.mxu0 0.0
    %1468 = vmatpush1.msra.mxu0 0.0
    %1469 = vmatprep.subr.mxu0 0.0
    %1470 = vmatpush1.msra.mxu0 0.0
    %1471 = vmatprep.subr.mxu0 0.0
    %1472 = vmatpush1.msra.mxu0 0.0
    %1473 = vmatprep.subr.mxu0 0.0
    %1474 = vmatpush1.msra.mxu0 0.0
    %1475 = vmatprep.subr.mxu0 0.0
    %1476 = vmatpush1.msra.mxu0 0.0
    %1477 = vmatprep.subr.mxu0 0.0
    %1478 = vmatpush1.msra.mxu0 0.0
    %1479 = vmatprep.subr.mxu0 0.0
    %1480 = vmatpush1.msra.mxu0 0.0
    %1481 = vmatprep.subr.mxu0 0.0
    %1482 = vmatpush1.msra.mxu0 0.0
    %1483 = vmatprep.subr.mxu0 0.0
    %1484 = vmatpush1.msra.mxu0 0.0
    %1485 = vmatprep.subr.mxu0 0.0
    %1486 = vmatpush1.msra.mxu0 0.0
    %1487 = vmatprep.subr.mxu0 0.0
    %1488 = vmatpush1.msra.mxu0 0.0
    %1489 = vmatprep.subr.mxu0 0.0
    %1490 = vmatpush1.msra.mxu0 0.0
    %1491 = vmatprep.subr.mxu0 0.0
    %1492 = vmatpush1.msra.mxu0 0.0
    %1493 = vmatprep.subr.mxu0 0.0
    %1494 = vmatpush1.msra.mxu0 0.0
    %1495 = vmatprep.subr.mxu0 0.0
    %1496 = vmatpush1.msra.mxu0 0.0
    %1497 = vmatprep.subr.mxu0 0.0
    %1498 = vmatpush1.msra.mxu0 0.0
    %1499 = vmatprep.subr.mxu0 0.0
    %1500 = vmatpush1.msra.mxu0 0.0
    %1501 = vmatprep.subr.mxu0 0.0
    %1502 = vmatpush1.msra.mxu0 0.0
    %1503 = vmatprep.subr.mxu0 0.0
    %1504 = vmatpush1.msra.mxu0 0.0
    %1505 = vmatprep.subr.mxu0 0.0
    %1506 = vmatpush1.msra.mxu0 0.0
    %1507 = vmatprep.subr.mxu0 0.0
    %1508 = vmatpush1.msra.mxu0 0.0
    %1509 = vmatprep.mubr.f32.mxu0 0.0
    %1510 = vmatmul.mubr.f32.gmra.mrb[0].mxu0 %v1443
    %v1511 = vpop.f32.mrb[0].mxu0
    %v1512 = vadd.f32 0.0, %v1511
    %v1513 = vpop.f32.mrb[0].mxu0
    %v1514 = vadd.f32 0.0, %v1513
    %1515 = vdwg.mxu0
    %v1516 = vld [vmem:[#allocation2 + $0x30] sm:$0xff]
    %v1517 = vadd.f32 %v1516, %v1512
    %v1518 = vxor.u32 %v1517, 2147483648
    %v1519 = vmul.f32 %v1518, 1.442695
    %v1520 = vpow.pop %v1519
    %v1521 = vadd.f32 %v1520, 1.0
    %v1522 = vrcp.pop %v1521
    %v1523 = vmul.f32 1.0, %v1522
    %v1524 = vtanh.pop %v1517
    %v1525 = vmul.f32 %v1523, %v1329
    %1527 = vrot.lane.b32.xlu0 %v1524, 64
    %v1528 = vpop.permute.xlu0 %1527
    %v1530 = vmul.f32 %v1523, %v1528
    %1532 = vrot.lane.b32.xlu0 %v1530, 32
    %v1533 = vpop.permute.xlu0 %1532
    %v1535 = vadd.f32 %v1525, %v1533
    %v1536 = vtanh.pop %v1535
    %1538 = vrot.lane.b32.xlu0 %v1536, 64
    %v1539 = vpop.permute.xlu0 %1538
    %v1541 = vmul.f32 %v1523, %v1539
    %1543 = vrot.lane.b32.xlu0 %v1541, 32
    %v1544 = vpop.permute.xlu0 %1543
    %v1545 = vsel %vm308, %v1544, 0
    %1547 = vmatprep.subr.mxu0 0.0
    %1548 = vmatpush1.msra.mxu0 %v44
    %1549 = vmatprep.subr.mxu0 0.0
    %1550 = vmatpush1.msra.mxu0 %v45
    %1551 = vmatprep.subr.mxu0 0.0
    %1552 = vmatpush1.msra.mxu0 %v46
    %1553 = vmatprep.subr.mxu0 0.0
    %1554 = vmatpush1.msra.mxu0 %v47
    %1555 = vmatprep.subr.mxu0 0.0
    %1556 = vmatpush1.msra.mxu0 0.0
    %1557 = vmatprep.subr.mxu0 0.0
    %1558 = vmatpush1.msra.mxu0 0.0
    %1559 = vmatprep.subr.mxu0 0.0
    %1560 = vmatpush1.msra.mxu0 0.0
    %1561 = vmatprep.subr.mxu0 0.0
    %1562 = vmatpush1.msra.mxu0 0.0
    %1563 = vmatprep.subr.mxu0 0.0
    %1564 = vmatpush1.msra.mxu0 0.0
    %1565 = vmatprep.subr.mxu0 0.0
    %1566 = vmatpush1.msra.mxu0 0.0
    %1567 = vmatprep.subr.mxu0 0.0
    %1568 = vmatpush1.msra.mxu0 0.0
    %1569 = vmatprep.subr.mxu0 0.0
    %1570 = vmatpush1.msra.mxu0 0.0
    %1571 = vmatprep.subr.mxu0 0.0
    %1572 = vmatpush1.msra.mxu0 0.0
    %1573 = vmatprep.subr.mxu0 0.0
    %1574 = vmatpush1.msra.mxu0 0.0
    %1575 = vmatprep.subr.mxu0 0.0
    %1576 = vmatpush1.msra.mxu0 0.0
    %1577 = vmatprep.subr.mxu0 0.0
    %1578 = vmatpush1.msra.mxu0 0.0
    %1579 = vmatprep.subr.mxu0 0.0
    %1580 = vmatpush1.msra.mxu0 0.0
    %1581 = vmatprep.subr.mxu0 0.0
    %1582 = vmatpush1.msra.mxu0 0.0
    %1583 = vmatprep.subr.mxu0 0.0
    %1584 = vmatpush1.msra.mxu0 0.0
    %1585 = vmatprep.subr.mxu0 0.0
    %1586 = vmatpush1.msra.mxu0 0.0
    %1587 = vmatprep.subr.mxu0 0.0
    %1588 = vmatpush1.msra.mxu0 0.0
    %1589 = vmatprep.subr.mxu0 0.0
    %1590 = vmatpush1.msra.mxu0 0.0
    %1591 = vmatprep.subr.mxu0 0.0
    %1592 = vmatpush1.msra.mxu0 0.0
    %1593 = vmatprep.subr.mxu0 0.0
    %1594 = vmatpush1.msra.mxu0 0.0
    %1595 = vmatprep.subr.mxu0 0.0
    %1596 = vmatpush1.msra.mxu0 0.0
    %1597 = vmatprep.subr.mxu0 0.0
    %1598 = vmatpush1.msra.mxu0 0.0
    %1599 = vmatprep.subr.mxu0 0.0
    %1600 = vmatpush1.msra.mxu0 0.0
    %1601 = vmatprep.subr.mxu0 0.0
    %1602 = vmatpush1.msra.mxu0 0.0
    %1603 = vmatprep.subr.mxu0 0.0
    %1604 = vmatpush1.msra.mxu0 0.0
    %1605 = vmatprep.subr.mxu0 0.0
    %1606 = vmatpush1.msra.mxu0 0.0
    %1607 = vmatprep.subr.mxu0 0.0
    %1608 = vmatpush1.msra.mxu0 0.0
    %1609 = vmatprep.subr.mxu0 0.0
    %1610 = vmatpush1.msra.mxu0 0.0
    %1611 = vmatprep.mubr.f32.mxu0 0.0
    %1612 = vmatmul.mubr.f32.gmra.mrb[0].mxu0 %v1545
    %v1613 = vpop.f32.mrb[0].mxu0
    %v1614 = vadd.f32 %v1514, %v1613
    %v1615 = vpop.f32.mrb[0].mxu0
    %1616 = vdwg.mxu0
    %v1617 = vadd.f32 %v1614, %v48
    %v1618 = vxor.u32 %v1617, 2147483648
    %v1619 = vmul.f32 %v1618, 1.442695
    %v1620 = vpow.pop %v1619
    %v1621 = vadd.f32 %v1620, 1.0
    %v1622 = vrcp.pop %v1621
    %v1623 = vmul.f32 1.0, %v1622
    %v1624 = vtanh.pop %v1617
    %v1625 = vmul.f32 %v1623, %v1429
    %1627 = vrot.lane.b32.xlu0 %v1624, 64
    %v1628 = vpop.permute.xlu0 %1627
    %v1630 = vmul.f32 %v1623, %v1628
    %1632 = vrot.lane.b32.xlu0 %v1630, 32
    %v1633 = vpop.permute.xlu0 %1632
    %v1635 = vadd.f32 %v1625, %v1633
    %v1636 = vtanh.pop %v1635
    %1638 = vrot.lane.b32.xlu0 %v1636, 64
    %v1639 = vpop.permute.xlu0 %1638
    %v1641 = vmul.f32 %v1623, %v1639
    %1644 = vrot.lane.b32.xlu0 %v1641, 64
    %v1645 = vpop.permute.xlu0 %1644
    %v1647 = vsel %vm308, %v1544, %v1645
    %v1649 = vsel %vm204, %v1647, 0
    %1651 = vmatprep.subr.mxu0 %v27
    %1652 = vmatpush1.msra.mxu0 %v26
    %1653 = vmatprep.subr.mxu0 %v29
    %1654 = vmatpush1.msra.mxu0 %v28
    %1655 = vmatprep.subr.mxu0 %v31
    %1656 = vmatpush1.msra.mxu0 %v30
    %1657 = vmatprep.subr.mxu0 %v33
    %1658 = vmatpush1.msra.mxu0 %v32
    %1659 = vmatprep.subr.mxu0 %v35
    %1660 = vmatpush1.msra.mxu0 %v34
    %1661 = vmatprep.subr.mxu0 %v37
    %1662 = vmatpush1.msra.mxu0 %v36
    %1663 = vmatprep.subr.mxu0 %v39
    %1664 = vmatpush1.msra.mxu0 %v38
    %1665 = vmatprep.subr.mxu0 %v41
    %1666 = vmatpush1.msra.mxu0 %v40
    %1667 = vmatprep.subr.mxu0 0.0
    %1668 = vmatpush1.msra.mxu0 0.0
    %1669 = vmatprep.subr.mxu0 0.0
    %1670 = vmatpush1.msra.mxu0 0.0
    %1671 = vmatprep.subr.mxu0 0.0
    %1672 = vmatpush1.msra.mxu0 0.0
    %1673 = vmatprep.subr.mxu0 0.0
    %1674 = vmatpush1.msra.mxu0 0.0
    %1675 = vmatprep.subr.mxu0 0.0
    %1676 = vmatpush1.msra.mxu0 0.0
    %1677 = vmatprep.subr.mxu0 0.0
    %1678 = vmatpush1.msra.mxu0 0.0
    %1679 = vmatprep.subr.mxu0 0.0
    %1680 = vmatpush1.msra.mxu0 0.0
    %1681 = vmatprep.subr.mxu0 0.0
    %1682 = vmatpush1.msra.mxu0 0.0
    %1683 = vmatprep.subr.mxu0 0.0
    %1684 = vmatpush1.msra.mxu0 0.0
    %1685 = vmatprep.subr.mxu0 0.0
    %1686 = vmatpush1.msra.mxu0 0.0
    %1687 = vmatprep.subr.mxu0 0.0
    %1688 = vmatpush1.msra.mxu0 0.0
    %1689 = vmatprep.subr.mxu0 0.0
    %1690 = vmatpush1.msra.mxu0 0.0
    %1691 = vmatprep.subr.mxu0 0.0
    %1692 = vmatpush1.msra.mxu0 0.0
    %1693 = vmatprep.subr.mxu0 0.0
    %1694 = vmatpush1.msra.mxu0 0.0
    %1695 = vmatprep.subr.mxu0 0.0
    %1696 = vmatpush1.msra.mxu0 0.0
    %1697 = vmatprep.subr.mxu0 0.0
    %1698 = vmatpush1.msra.mxu0 0.0
    %1699 = vmatprep.subr.mxu0 0.0
    %1700 = vmatpush1.msra.mxu0 0.0
    %1701 = vmatprep.subr.mxu0 0.0
    %1702 = vmatpush1.msra.mxu0 0.0
    %1703 = vmatprep.subr.mxu0 0.0
    %1704 = vmatpush1.msra.mxu0 0.0
    %1705 = vmatprep.subr.mxu0 0.0
    %1706 = vmatpush1.msra.mxu0 0.0
    %1707 = vmatprep.subr.mxu0 0.0
    %1708 = vmatpush1.msra.mxu0 0.0
    %1709 = vmatprep.subr.mxu0 0.0
    %1710 = vmatpush1.msra.mxu0 0.0
    %1711 = vmatprep.subr.mxu0 0.0
    %1712 = vmatpush1.msra.mxu0 0.0
    %1713 = vmatprep.subr.mxu0 0.0
    %1714 = vmatpush1.msra.mxu0 0.0
    %1715 = vmatprep.mubr.f32.mxu0 0.0
    %1716 = vmatmul.mubr.f32.gmra.mrb[0].mxu0 %v1649
    %v1717 = vpop.f32.mrb[0].mxu0
    %v1718 = vadd.f32 0.0, %v1717
    %v1719 = vpop.f32.mrb[0].mxu0
    %v1720 = vadd.f32 0.0, %v1719
    %1721 = vdwg.mxu0
    %v1722 = vld [vmem:[#allocation2 + $0x38] sm:$0xff]
    %v1723 = vadd.f32 %v1722, %v1718
    %v1724 = vxor.u32 %v1723, 2147483648
    %v1725 = vmul.f32 %v1724, 1.442695
    %v1726 = vpow.pop %v1725
    %v1727 = vadd.f32 %v1726, 1.0
    %v1728 = vrcp.pop %v1727
    %v1729 = vmul.f32 1.0, %v1728
    %v1730 = vtanh.pop %v1723
    %v1731 = vmul.f32 %v1729, %v1535
    %1733 = vrot.lane.b32.xlu0 %v1730, 64
    %v1734 = vpop.permute.xlu0 %1733
    %v1736 = vmul.f32 %v1729, %v1734
    %1738 = vrot.lane.b32.xlu0 %v1736, 32
    %v1739 = vpop.permute.xlu0 %1738
    %v1741 = vadd.f32 %v1731, %v1739
    %v1742 = vtanh.pop %v1741
    %1744 = vrot.lane.b32.xlu0 %v1742, 64
    %v1745 = vpop.permute.xlu0 %1744
    %v1747 = vmul.f32 %v1729, %v1745
    %1749 = vrot.lane.b32.xlu0 %v1747, 32
    %v1750 = vpop.permute.xlu0 %1749
    %v1751 = vsel %vm308, %v1750, 0
    %1753 = vmatprep.subr.mxu0 0.0
    %1754 = vmatpush1.msra.mxu0 %v44
    %1755 = vmatprep.subr.mxu0 0.0
    %1756 = vmatpush1.msra.mxu0 %v45
    %1757 = vmatprep.subr.mxu0 0.0
    %1758 = vmatpush1.msra.mxu0 %v46
    %1759 = vmatprep.subr.mxu0 0.0
    %1760 = vmatpush1.msra.mxu0 %v47
    %1761 = vmatprep.subr.mxu0 0.0
    %1762 = vmatpush1.msra.mxu0 0.0
    %1763 = vmatprep.subr.mxu0 0.0
    %1764 = vmatpush1.msra.mxu0 0.0
    %1765 = vmatprep.subr.mxu0 0.0
    %1766 = vmatpush1.msra.mxu0 0.0
    %1767 = vmatprep.subr.mxu0 0.0
    %1768 = vmatpush1.msra.mxu0 0.0
    %1769 = vmatprep.subr.mxu0 0.0
    %1770 = vmatpush1.msra.mxu0 0.0
    %1771 = vmatprep.subr.mxu0 0.0
    %1772 = vmatpush1.msra.mxu0 0.0
    %1773 = vmatprep.subr.mxu0 0.0
    %1774 = vmatpush1.msra.mxu0 0.0
    %1775 = vmatprep.subr.mxu0 0.0
    %1776 = vmatpush1.msra.mxu0 0.0
    %1777 = vmatprep.subr.mxu0 0.0
    %1778 = vmatpush1.msra.mxu0 0.0
    %1779 = vmatprep.subr.mxu0 0.0
    %1780 = vmatpush1.msra.mxu0 0.0
    %1781 = vmatprep.subr.mxu0 0.0
    %1782 = vmatpush1.msra.mxu0 0.0
    %1783 = vmatprep.subr.mxu0 0.0
    %1784 = vmatpush1.msra.mxu0 0.0
    %1785 = vmatprep.subr.mxu0 0.0
    %1786 = vmatpush1.msra.mxu0 0.0
    %1787 = vmatprep.subr.mxu0 0.0
    %1788 = vmatpush1.msra.mxu0 0.0
    %1789 = vmatprep.subr.mxu0 0.0
    %1790 = vmatpush1.msra.mxu0 0.0
    %1791 = vmatprep.subr.mxu0 0.0
    %1792 = vmatpush1.msra.mxu0 0.0
    %1793 = vmatprep.subr.mxu0 0.0
    %1794 = vmatpush1.msra.mxu0 0.0
    %1795 = vmatprep.subr.mxu0 0.0
    %1796 = vmatpush1.msra.mxu0 0.0
    %1797 = vmatprep.subr.mxu0 0.0
    %1798 = vmatpush1.msra.mxu0 0.0
    %1799 = vmatprep.subr.mxu0 0.0
    %1800 = vmatpush1.msra.mxu0 0.0
    %1801 = vmatprep.subr.mxu0 0.0
    %1802 = vmatpush1.msra.mxu0 0.0
    %1803 = vmatprep.subr.mxu0 0.0
    %1804 = vmatpush1.msra.mxu0 0.0
    %1805 = vmatprep.subr.mxu0 0.0
    %1806 = vmatpush1.msra.mxu0 0.0
    %1807 = vmatprep.subr.mxu0 0.0
    %1808 = vmatpush1.msra.mxu0 0.0
    %1809 = vmatprep.subr.mxu0 0.0
    %1810 = vmatpush1.msra.mxu0 0.0
    %1811 = vmatprep.subr.mxu0 0.0
    %1812 = vmatpush1.msra.mxu0 0.0
    %1813 = vmatprep.subr.mxu0 0.0
    %1814 = vmatpush1.msra.mxu0 0.0
    %1815 = vmatprep.subr.mxu0 0.0
    %1816 = vmatpush1.msra.mxu0 0.0
    %1817 = vmatprep.mubr.f32.mxu0 0.0
    %1818 = vmatmul.mubr.f32.gmra.mrb[0].mxu0 %v1751
    %v1819 = vpop.f32.mrb[0].mxu0
    %v1820 = vadd.f32 %v1720, %v1819
    %v1821 = vpop.f32.mrb[0].mxu0
    %1822 = vdwg.mxu0
    %v1823 = vadd.f32 %v1820, %v48
    %v1824 = vxor.u32 %v1823, 2147483648
    %v1825 = vmul.f32 %v1824, 1.442695
    %v1826 = vpow.pop %v1825
    %v1827 = vadd.f32 %v1826, 1.0
    %v1828 = vrcp.pop %v1827
    %v1829 = vmul.f32 1.0, %v1828
    %v1830 = vtanh.pop %v1823
    %v1831 = vmul.f32 %v1829, %v1635
    %1833 = vrot.lane.b32.xlu0 %v1830, 64
    %v1834 = vpop.permute.xlu0 %1833
    %v1836 = vmul.f32 %v1829, %v1834
    %1838 = vrot.lane.b32.xlu0 %v1836, 32
    %v1839 = vpop.permute.xlu0 %1838
    %v1841 = vadd.f32 %v1831, %v1839
    %v1842 = vtanh.pop %v1841
    %1844 = vrot.lane.b32.xlu0 %v1842, 64
    %v1845 = vpop.permute.xlu0 %1844
    %v1847 = vmul.f32 %v1829, %v1845
    %1849 = vset.pattern.permute.xlu0 0
    %1850 = vperm.xlu0 %1849, %v50
    %v1851 = vpop.permute.xlu0 %1850
    %1854 = vrot.lane.b32.xlu0 %v1847, 32
    %v1855 = vpop.permute.xlu0 %1854
    %v1857 = vsel %vm308, %v49, 0
    %v1859 = vsel %vm308, %v1855, 0
    %1861 = vmatprep.subr.mxu0 0.0
    %1862 = vmatpush1.xpose.msra.mxu0 %v1859
    %1863 = vmatprep.subr.mxu0 0.0
    %1864 = vmatpush1.xpose.msra.mxu0 0.0
    %1865 = vmatprep.subr.mxu0 0.0
    %1866 = vmatpush1.xpose.msra.mxu0 0.0
    %1867 = vmatprep.subr.mxu0 0.0
    %1868 = vmatpush1.xpose.msra.mxu0 0.0
    %1869 = vmatprep.subr.mxu0 0.0
    %1870 = vmatpush1.xpose.msra.mxu0 0.0
    %1871 = vmatprep.subr.mxu0 0.0
    %1872 = vmatpush1.xpose.msra.mxu0 0.0
    %1873 = vmatprep.subr.mxu0 0.0
    %1874 = vmatpush1.xpose.msra.mxu0 0.0
    %1875 = vmatprep.subr.mxu0 0.0
    %1876 = vmatpush1.xpose.msra.mxu0 0.0
    %1877 = vmatprep.subr.mxu0 0.0
    %1878 = vmatpush1.xpose.msra.mxu0 0.0
    %1879 = vmatprep.subr.mxu0 0.0
    %1880 = vmatpush1.xpose.msra.mxu0 0.0
    %1881 = vmatprep.subr.mxu0 0.0
    %1882 = vmatpush1.xpose.msra.mxu0 0.0
    %1883 = vmatprep.subr.mxu0 0.0
    %1884 = vmatpush1.xpose.msra.mxu0 0.0
    %1885 = vmatprep.subr.mxu0 0.0
    %1886 = vmatpush1.xpose.msra.mxu0 0.0
    %1887 = vmatprep.subr.mxu0 0.0
    %1888 = vmatpush1.xpose.msra.mxu0 0.0
    %1889 = vmatprep.subr.mxu0 0.0
    %1890 = vmatpush1.xpose.msra.mxu0 0.0
    %1891 = vmatprep.subr.mxu0 0.0
    %1892 = vmatpush1.xpose.msra.mxu0 0.0
    %1893 = vmatprep.subr.mxu0 0.0
    %1894 = vmatpush1.xpose.msra.mxu0 0.0
    %1895 = vmatprep.subr.mxu0 0.0
    %1896 = vmatpush1.xpose.msra.mxu0 0.0
    %1897 = vmatprep.subr.mxu0 0.0
    %1898 = vmatpush1.xpose.msra.mxu0 0.0
    %1899 = vmatprep.subr.mxu0 0.0
    %1900 = vmatpush1.xpose.msra.mxu0 0.0
    %1901 = vmatprep.subr.mxu0 0.0
    %1902 = vmatpush1.xpose.msra.mxu0 0.0
    %1903 = vmatprep.subr.mxu0 0.0
    %1904 = vmatpush1.xpose.msra.mxu0 0.0
    %1905 = vmatprep.subr.mxu0 0.0
    %1906 = vmatpush1.xpose.msra.mxu0 0.0
    %1907 = vmatprep.subr.mxu0 0.0
    %1908 = vmatpush1.xpose.msra.mxu0 0.0
    %1909 = vmatprep.subr.mxu0 0.0
    %1910 = vmatpush1.xpose.msra.mxu0 0.0
    %1911 = vmatprep.subr.mxu0 0.0
    %1912 = vmatpush1.xpose.msra.mxu0 0.0
    %1913 = vmatprep.subr.mxu0 0.0
    %1914 = vmatpush1.xpose.msra.mxu0 0.0
    %1915 = vmatprep.subr.mxu0 0.0
    %1916 = vmatpush1.xpose.msra.mxu0 0.0
    %1917 = vmatprep.subr.mxu0 0.0
    %1918 = vmatpush1.xpose.msra.mxu0 0.0
    %1919 = vmatprep.subr.mxu0 0.0
    %1920 = vmatpush1.xpose.msra.mxu0 0.0
    %1921 = vmatprep.subr.mxu0 0.0
    %1922 = vmatpush1.xpose.msra.mxu0 0.0
    %1923 = vmatprep.subr.mxu0 0.0
    %1924 = vmatpush1.xpose.msra.mxu0 0.0
    %1925 = vmatprep.mubr.f32.mxu0 0.0
    %1926 = vmatmul.mubr.f32.gmra.mrb[0].mxu0 %v1857
    %v1927 = vpop.f32.mrb[0].mxu0
    %v1928 = vadd.f32 %v1851, %v1927
    %v1929 = vpop.f32.mrb[0].mxu0
    %1930 = vdwg.mxu0
    %1932 = vset.pattern.permute.xlu0 0
    %1933 = vperm.xlu0 %1932, %v51
    %v1934 = vpop.permute.xlu0 %1933
    %v1936 = vmul.f32 %v1934, %v1928
    %1938 = vset.pattern.permute.xlu0 0
    %1939 = vperm.xlu0 %1938, %v52
    %v1940 = vpop.permute.xlu0 %1939
    %v1942 = vadd.f32 %v1936, %v1940
    %1944 = vrot.lane.b32.xlu0 %v53, 2
    %v1945 = vpop.permute.xlu0 %1944
    %vm1947 = vcmask 15360
    %v1948 = vsel %vm1947, %v1942, %v1945
    %vm1949 = vcmask 16384
    %v1950 = vsel %vm1949, %v1948, -inf
    %1951 = vmax.xlane.f32.xlu0 %v1950
    %v1952 = vpop.xlane.xlu0 %1951
    %v1953 = vrot.slane %v1952, 4
    %v1954 = vmax.f32 %v1952, %v1953
    %v1955 = vrot.slane %v1954, 2
    %v1956 = vmax.f32 %v1954, %v1955
    %v1957 = vrot.slane %v1956, 1
    %v1958 = vmax.f32 %v1956, %v1957
    %s1959 = vtos %v1958
    %v1960 = vstv %s1959
    %v1961 = vsub.f32 %v1948, %v1960
    %v1962 = vmul.f32 %v1961, 1.442695
    %v1963 = vpow.pop %v1962
    %v1964 = vsel %vm1949, %v1963, 0.0
    %1965 = vadd.xlane.f32.xlu0 %v1964
    %v1966 = vpop.xlane.xlu0 %1965
    %v1967 = vrot.slane %v1966, 4
    %v1968 = vadd.f32 %v1966, %v1967
    %v1969 = vrot.slane %v1968, 2
    %v1970 = vadd.f32 %v1968, %v1969
    %v1971 = vrot.slane %v1970, 1
    %v1972 = vadd.f32 %v1970, %v1971
    %s1973 = vtos %v1972
    %v1974 = vstv %s1973
    %v1975 = vrcp.pop %v1974
    %s1976 = vtos %v1975
    %v1977 = vstv %s1976
    %v1978 = vmul.f32 %v1963, %v1977
    %1979 = vst.msk [vmem:[#allocation6] sm:$0x1] %vm1949, %v1978
    // Predicated region
    $region14: #{tpu_custom_call.1} parent=1 // pred_check
      _
    $region15: #{tpu_custom_call.1} parent=1 // pred_check_branch
      %1981 = sbr.rel (0) target = $region17
    $region16: #{tpu_custom_call.1} parent=1 // pred_region
      %s1983 = ssub.s32 16, 16
      %1984 = vsyncadd [#allocation5], %s1983
      %s1986 = sshll.u32 [#allocation6], 4
      %s1987 = int_to_ptr.vmem [resolvable:$true] %s1986
      %1989 = dma.vmem_to_hbm [thread:$0]  %s1987, 16, %s2, [#allocation5]
    $region17: #{tpu_custom_call.1} parent=1 // pred_fallthru
      _
    // Predicated region
    $region18: #{tpu_custom_call.1} parent=1 // pred_check
      _
    $region19: #{tpu_custom_call.1} parent=1 // pred_check_branch
      %1991 = sbr.rel (0) target = $region21
    $region20: #{tpu_custom_call.1} parent=1 // pred_region
      %1992 = dma.done [#allocation5], 16
    $region21: #{tpu_custom_call.1} parent=1 // pred_fallthru
      _
    %1993 = vsyncpa [#allocation4], 1
    %1994 = vsyncpa [#allocation5], 1

</llo_original>
